<compile_context>
chip_gen: v5e
topology: v5e:2x2
jax: 0.10.0
libtpu: 0.0.40
codegen_flags: <defaults>
</compile_context>

<pallas_src>
import numpy as np
import jax
import jax.numpy as jnp
from jax.experimental import pallas as pl
from jax.experimental.pallas import tpu as pltpu

LANE = 128
SUBLANE = 8


def _ceil_to(x: int, m: int) -> int:
    return -(-x // m) * m


def _vmem_limit_bytes() -> int:
    """Generation-aware VMEM limit: most of VMEM minus compiler-scratch headroom."""
    cap = 64 * 1024 * 1024                      # conservative fallback (v7x-sized)
    try:
        cap = int(pltpu.get_tpu_info().vmem_capacity_bytes)
    except Exception:
        pass
    return int(max(32 * 1024 * 1024,
                   min(cap - 12 * 1024 * 1024, 112 * 1024 * 1024)))


# ----------------------------------------------------------------------------
# Deterministic "parameters": fused, packed, lane-padded windowed Fourier basis
# ----------------------------------------------------------------------------
def make_packed_dft_basis(n_fft: int, win_length: int, compute_dtype):
    """Returns (W, n_real, n_imag) with W: (n_fft, n_real + n_imag).

    Columns [0, cutoff) hold real bins 0..cutoff-1 (zero padded to n_real, a
    multiple of 128).  Columns [n_real, n_real+cutoff-1) hold imag bins
    1..cutoff-1 (imag of DC is identically zero and dropped), zero padded to
    n_imag.  For power-of-two n_fft this gives N = n_fft + 128 instead of the
    naive n_fft + 256 -> fewer wasted MXU columns.
    """
    assert n_fft % 2 == 0
    cutoff = n_fft // 2 + 1
    n_real = _ceil_to(cutoff, LANE)
    n_imag = _ceil_to(cutoff - 1, LANE)
    fourier = np.fft.fft(np.eye(n_fft))
    real = np.real(fourier[:cutoff, :])
    imag = np.imag(fourier[:cutoff, :])
    # periodic (fftbins=True) Hann window, centered-padded to n_fft
    n = np.arange(win_length)
    win = 0.5 - 0.5 * np.cos(2.0 * np.pi * n / win_length)
    lpad = (n_fft - win_length) // 2
    win_full = np.zeros(n_fft)
    win_full[lpad:lpad + win_length] = win
    w = np.zeros((n_fft, n_real + n_imag))
    w[:, :cutoff] = (real * win_full[None, :]).T
    w[:, n_real:n_real + cutoff - 1] = (imag[1:, :] * win_full[None, :]).T
    return jnp.asarray(w, dtype=compute_dtype), n_real, n_imag


# ----------------------------------------------------------------------------
# Glue (cheap, O(T)): reflect pad + hop-chunking, per-frame mask
# ----------------------------------------------------------------------------
def chunk_signal(x, n_fft: int, hop: int, c_total: int):
    """x: (B, T) -> (B, c_total, hop) f32 hop-sized chunks of the reflect-padded
    signal (zero padded at the end so every in-kernel window stays in bounds)."""
    B, _ = x.shape
    pad = n_fft // 2
    xp = jnp.pad(x, ((0, 0), (pad, pad)), mode="reflect")
    need = c_total * hop
    if need > xp.shape[1]:
        xp = jnp.pad(xp, ((0, 0), (0, need - xp.shape[1])))
    return xp[:, :need].reshape(B, c_total, hop).astype(jnp.float32)


def frame_mask(mask, hop: int, F: int):
    """mask: (B, 1, T) -> per-frame mask (B, F).  Frame f uses mask[..., f*hop] for
    f*hop < T, else 0 (matches torch F.pad(left=1s, right=0s) + strided slice,
    including the T % hop == 0 last-frame-is-zero case)."""
    _, _, T = mask.shape
    idx = jnp.arange(F) * hop
    g = mask[:, 0, jnp.minimum(idx, T - 1)]
    return jnp.where(idx[None, :] < T, g, 0.0).astype(jnp.float32)


def choose_f_tile(F: int, n_fft: int, hop: int, n_cols: int, S: int,
                  budget_bytes: int, w_itemsize: int) -> int:
    """Largest frame tile (multiple of 8) whose VMEM working set fits the budget."""
    s_extra = _ceil_to(max(S - 1, 0), SUBLANE)
    basis_buffers = 1 if n_fft * n_cols * w_itemsize > 2 * 1024 * 1024 else 2

    def vmem_bytes(ft):
        f_pad = _ceil_to(max(F, ft), ft)
        c_total = f_pad + s_extra
        audio = 2 * 2 * c_total * hop * 4                 # y & yh blocks, double-buffered, f32
        basis = basis_buffers * n_fft * n_cols * w_itemsize
        maskb = 2 * ft * LANE * 4
        temps = 6 * ft * n_cols * 4 + 2 * (ft + s_extra) * hop * 4
        outb = 2 * SUBLANE * LANE * 4
        return audio + basis + maskb + temps + outb

    ft = 1024
    while ft > SUBLANE and vmem_bytes(ft) > budget_bytes:
        ft //= 2
    return max(SUBLANE, min(ft, _ceil_to(F, SUBLANE)))


# ----------------------------------------------------------------------------
# Pallas kernel: per-(batch, frame-tile) masked spectral squared-error partials
# ----------------------------------------------------------------------------
def spectral_sq_sum(y_chunks, yh_chunks, mask_sq, w, *, n_fft, hop,
                    n_real, n_imag, f_tile, vmem_limit):
    """(B,) per-batch sum over (freq, frames) of mask^2 * (|Y| - |Yh|)^2."""
    B, c_total, _ = y_chunks.shape
    _, f_pad, _ = mask_sq.shape
    assert f_pad % f_tile == 0
    nt = f_pad // f_tile
    S = n_fft // hop
    s_extra = _ceil_to(max(S - 1, 0), SUBLANE)
    assert c_total == f_pad + s_extra
    w_rows = f_tile + s_extra
    n_cols = n_real + n_imag
    n_main = min(n_imag, n_real - 1)
    cdt = w.dtype

    def kernel(yc_ref, yhc_ref, m_ref, w_ref, out_ref):
        t = pl.program_id(1)
        base = pl.multiple_of(t * f_tile, SUBLANE)
        # Hop-chunked window of the reflect-padded audio for this frame tile.
        ywin = yc_ref[0, pl.ds(base, w_rows), :]           # (w_rows, hop) f32
        hwin = yhc_ref[0, pl.ds(base, w_rows), :]
        # In-kernel framing:  frame f = concat_s chunk[f + s], hence
        #   frames @ W = sum_s chunks[s : s + f_tile] @ W[s*hop : (s+1)*hop].
        # Two dots per s (no concat copy) share the same resident W slice.
        acc_y = None
        acc_h = None
        for s in range(S):
            w_s = w_ref[s * hop:(s + 1) * hop, :]          # (hop, n_cols)
            cy = ywin[s:s + f_tile, :].astype(cdt)
            ch = hwin[s:s + f_tile, :].astype(cdt)
            py = jnp.dot(cy, w_s, preferred_element_type=jnp.float32)
            ph = jnp.dot(ch, w_s, preferred_element_type=jnp.float32)
            acc_y = py if acc_y is None else acc_y + py
            acc_h = ph if acc_h is None else acc_h + ph

        # Magnitudes.  Real bins sit at cols [0, n_real); packed imag bin k (1..cutoff-1)
        # sits at col n_real + k - 1, so realign with a static one-lane-offset slice.
        # Real-only zero-padded columns beyond n_main are identical for y and yh and
        # never contribute to d.
        def mags(acc):
            main = jnp.sqrt(acc[:, 1:1 + n_main] ** 2
                            + acc[:, n_real:n_real + n_main] ** 2)    # bins 1..n_main
            dc = jnp.abs(acc[:, 0:1])                                  # bin 0 (imag == 0)
            return main, dc

        my, dy = mags(acc_y)
        mh, dh = mags(acc_h)
        d = my - mh
        ddc = dy - dh
        # Reduce over freq first, then one per-row multiply by the squared mask.
        row = jnp.sum(d * d, axis=-1, keepdims=True) + ddc * ddc       # (f_tile, 1)
        s_val = jnp.sum(row * m_ref[0])
        out_ref[...] = jnp.full(out_ref.shape, s_val, dtype=out_ref.dtype)

    # Resident basis (constant index map).  Single-buffer it when large so e.g.
    # n_fft=4096 (34 MiB bf16) fits v7x's 64 MiB VMEM.
    w_spec = pl.BlockSpec((n_fft, n_cols), lambda b, t: (0, 0))
    if n_fft * n_cols * w.dtype.itemsize > 2 * 1024 * 1024:
        try:
            w_spec = pl.BlockSpec((n_fft, n_cols), lambda b, t: (0, 0),
                                  pipeline_mode=pl.Buffered(1))
        except (TypeError, AttributeError):   # older pallas without pipeline_mode
            pass

    flops = 2 * B * 2 * f_pad * n_fft * n_cols + 10 * B * f_pad * n_cols
    transcendentals = 2 * B * f_pad * n_main
    bytes_accessed = (2 * B * c_total * hop * 4
                      + n_fft * n_cols * w.dtype.itemsize
                      + B * f_pad * 4
                      + B * nt * SUBLANE * LANE * 4)

    out = pl.pallas_call(
        kernel,
        out_shape=jax.ShapeDtypeStruct((B, nt, SUBLANE, LANE), jnp.float32),
        grid_spec=pltpu.PrefetchScalarGridSpec(
            num_scalar_prefetch=0,
            grid=(B, nt),         # both parallel: megacore / v7x two-TC friendly
            in_specs=[
                pl.BlockSpec((1, c_total, hop), lambda b, t: (b, 0, 0)),
                pl.BlockSpec((1, c_total, hop), lambda b, t: (b, 0, 0)),
                pl.BlockSpec((1, f_tile, 1), lambda b, t: (b, t, 0)),
                w_spec,
            ],
            out_specs=pl.BlockSpec((1, 1, SUBLANE, LANE), lambda b, t: (b, t, 0, 0)),
        ),
        compiler_params=pltpu.CompilerParams(
            dimension_semantics=("parallel", "parallel"),
            vmem_limit_bytes=int(vmem_limit),
        ),
        cost_estimate=pl.CostEstimate(
            flops=int(flops),
            transcendentals=int(transcendentals),
            bytes_accessed=int(bytes_accessed),
        ),
    )(y_chunks, yh_chunks, mask_sq, w)
    return out[:, :, 0, 0].sum(axis=1)                                  # (B,)


# ----------------------------------------------------------------------------
# Module-equivalent wrapper
# ----------------------------------------------------------------------------
class MultiResolutionSpectralLossPallas:
    def __init__(self, n_ffts, hop_lengths, win_lengths=None, window="hann",
                 log=False, compute_dtype=jnp.bfloat16):
        if win_lengths is None:
            win_lengths = n_ffts
        assert len(n_ffts) == len(hop_lengths) == len(win_lengths)
        assert window == "hann"
        assert not log   # TODO(synk): log=True branch (safe_log magnitudes) not implemented.
        self.compute_dtype = jnp.dtype(compute_dtype)
        self.cfgs = []
        self.bases = []
        for n_fft, hop, wl in zip(n_ffts, hop_lengths, win_lengths):
            n_fft, hop, wl = int(n_fft), int(hop), int(wl)
            assert n_fft % hop == 0, "in-kernel framing requires hop | n_fft"
            self.cfgs.append((n_fft, hop, wl))
            self.bases.append(make_packed_dft_basis(n_fft, wl, self.compute_dtype))
        self.vmem_limit = _vmem_limit_bytes()
        self.vmem_budget = self.vmem_limit - 8 * 1024 * 1024

    def __call__(self, y, yh, mask):
        """y, yh: (B, T) float; mask: (B, 1, T) float. Returns scalar loss."""
        B, T = y.shape
        loss = 0.0
        for (n_fft, hop, _), (w, n_real, n_imag) in zip(self.cfgs, self.bases):
            F = T // hop + 1
            S = n_fft // hop
            n_cols = n_real + n_imag
            f_tile = choose_f_tile(F, n_fft, hop, n_cols, S,
                                   self.vmem_budget, self.compute_dtype.itemsize)
            f_pad = _ceil_to(F, f_tile)
            s_extra = _ceil_to(max(S - 1, 0), SUBLANE)
            c_total = f_pad + s_extra

            yc = chunk_signal(y, n_fft, hop, c_total)
            yhc = chunk_signal(yh, n_fft, hop, c_total)
            m = frame_mask(mask, hop, F)                    # (B, F)
            m = m * m                                       # torch masks |Y|: loss = d^2 * m^2
            m = jnp.pad(m, ((0, 0), (0, f_pad - F)))[:, :, None]   # (B, f_pad, 1)

            sums = spectral_sq_sum(yc, yhc, m, w, n_fft=n_fft, hop=hop,
                                   n_real=n_real, n_imag=n_imag,
                                   f_tile=f_tile, vmem_limit=self.vmem_limit)
            loss = loss + jnp.mean(jnp.sqrt(sums))
        return loss / len(self.cfgs)


# ----------------------------------------------------------------------------
# Independent pure-JAX reference (full-width un-packed basis, gather framing):
# validates the in-kernel framing, the packed basis and the masked reduction.
# Same compute-dtype rounding of frames/basis so tolerances stay tight.
# ----------------------------------------------------------------------------
def reference_loss(y, yh, mask, cfgs, compute_dtype):
    B, T = y.shape
    total = 0.0
    for (n_fft, hop, wl) in cfgs:
        cutoff = n_fft // 2 + 1
        pad = n_fft // 2
        F = T // hop + 1
        fourier = np.fft.fft(np.eye(n_fft))
        n = np.arange(wl)
        win = 0.5 - 0.5 * np.cos(2.0 * np.pi * n / wl)
        wf = np.zeros(n_fft)
        wf[(n_fft - wl) // 2:(n_fft - wl) // 2 + wl] = win
        rw = jnp.asarray(np.real(fourier[:cutoff]) * wf[None, :],
                         compute_dtype).astype(jnp.float32)
        iw = jnp.asarray(np.imag(fourier[:cutoff]) * wf[None, :],
                         compute_dtype).astype(jnp.float32)

        def mag(x):
            xp = jnp.pad(x, ((0, 0), (pad, pad)), mode="reflect")
            xp = xp.astype(compute_dtype).astype(jnp.float32)
            idx = jnp.arange(F)[:, None] * hop + jnp.arange(n_fft)[None, :]
            fr = xp[:, idx]                                           # (B, F, n_fft)
            re = jnp.einsum("bfn,cn->bfc", fr, rw,
                            precision=jax.lax.Precision.HIGHEST)
            im = jnp.einsum("bfn,cn->bfc", fr, iw,
                            precision=jax.lax.Precision.HIGHEST)
            return jnp.sqrt(re * re + im * im)

        m = frame_mask(mask, hop, F)                                  # (B, F)
        d = (mag(y) - mag(yh)) * m[:, :, None]
        sums = jnp.sum(d * d, axis=(1, 2))
        total = total + jnp.mean(jnp.sqrt(sums))
    return total / len(cfgs)


if __name__ == "__main__":
    key = jax.random.PRNGKey(0)
    k1, k2, k3 = jax.random.split(key, 3)

    B, T = 2, 128
    n_ffts = [32, 64]
    hop_lengths = [8, 16]

    y = jax.random.normal(k1, (B, T), dtype=jnp.float32)
    yh = jax.random.normal(k2, (B, T), dtype=jnp.float32)
    mask = (jax.random.uniform(k3, (B, 1, T)) > 0.2).astype(jnp.float32)

    loss_mod = MultiResolutionSpectralLossPallas(n_ffts, hop_lengths)
    loss_fn = jax.jit(loss_mod.__call__)
    loss = jax.block_until_ready(loss_fn(y, yh, mask))

    ref = jax.block_until_ready(
        reference_loss(y, yh, mask, loss_mod.cfgs, loss_mod.compute_dtype))

    assert np.allclose(np.asarray(loss, dtype=np.float32),
                       np.asarray(ref, dtype=np.float32),
                       rtol=1e-3, atol=1e-3), (loss, ref)
    print("KERNEL_OK")
</pallas_src>

<mosaic_0001>
module attributes {stable_mosaic.version = 11 : i64} {
  func.func @kernel(%arg0: i32, %arg1: i32, %arg2: memref<1x32x8xf32, #tpu.memory_space<vmem>>, %arg3: memref<1x32x8xf32, #tpu.memory_space<vmem>>, %arg4: memref<1x24x1xf32, #tpu.memory_space<vmem>>, %arg5: memref<32x256xbf16, #tpu.memory_space<vmem>>, %arg6: memref<1x1x8x128xf32, #tpu.memory_space<vmem>>) attributes {dimension_semantics = [#tpu.dimension_semantics<parallel>, #tpu.dimension_semantics<parallel>], iteration_bounds = array<i64: 2, 1>, scalar_prefetch = 0 : i64, scratch_operands = 0 : i64, tpu.core_type = #tpu.core_type<tc>, window_params = [{transform_indices = @transform_0, window_bounds = array<i64: 1, 32, 8>}, {transform_indices = @transform_1, window_bounds = array<i64: 1, 32, 8>}, {transform_indices = @transform_2, window_bounds = array<i64: 1, 24, 1>}, {pipeline_mode = #tpu.pipeline_mode<synchronous>, transform_indices = @transform_3, window_bounds = array<i64: 32, 256>}, {transform_indices = @transform_4, window_bounds = array<i64: 1, 1, 8, 128>}]} {
    %c24_i32 = arith.constant 24 : i32
    %0 = arith.muli %arg1, %c24_i32 : i32
    %1 = tpu.assume_multiple %0, 8 : i32
    %c0 = arith.constant 0 : index
    %2 = arith.index_cast %1 : i32 to index
    %c0_0 = arith.constant 0 : index
    %3 = vector.load %arg2[%c0, %2, %c0_0] : memref<1x32x8xf32, #tpu.memory_space<vmem>>, vector<1x32x8xf32>
    %4 = vector.shape_cast %3 : vector<1x32x8xf32> to vector<32x8xf32>
    %c0_1 = arith.constant 0 : index
    %5 = arith.index_cast %1 : i32 to index
    %c0_2 = arith.constant 0 : index
    %6 = vector.load %arg3[%c0_1, %5, %c0_2] : memref<1x32x8xf32, #tpu.memory_space<vmem>>, vector<1x32x8xf32>
    %7 = vector.shape_cast %6 : vector<1x32x8xf32> to vector<32x8xf32>
    %c0_3 = arith.constant 0 : index
    %c0_4 = arith.constant 0 : index
    %8 = vector.load %arg5[%c0_3, %c0_4] : memref<32x256xbf16, #tpu.memory_space<vmem>>, vector<8x256xbf16>
    %9 = vector.extract_strided_slice %4 {offsets = [0, 0], sizes = [24, 8], strides = [1, 1]} : vector<32x8xf32> to vector<24x8xf32>
    %10 = arith.truncf %9 : vector<24x8xf32> to vector<24x8xbf16>
    %11 = vector.extract_strided_slice %7 {offsets = [0, 0], sizes = [24, 8], strides = [1, 1]} : vector<32x8xf32> to vector<24x8xf32>
    %12 = arith.truncf %11 : vector<24x8xf32> to vector<24x8xbf16>
    %cst = arith.constant dense<0.000000e+00> : vector<24x256xf32>
    %13 = tpu.matmul %10, %8, %cst {dimension_numbers = #tpu.dot_dimension_numbers<[1], [0], [0], [1], [0, 0, 1, 1], [], []>} : vector<24x8xbf16>, vector<8x256xbf16>, vector<24x256xf32> -> vector<24x256xf32>
    %cst_5 = arith.constant dense<0.000000e+00> : vector<24x256xf32>
    %14 = tpu.matmul %12, %8, %cst_5 {dimension_numbers = #tpu.dot_dimension_numbers<[1], [0], [0], [1], [0, 0, 1, 1], [], []>} : vector<24x8xbf16>, vector<8x256xbf16>, vector<24x256xf32> -> vector<24x256xf32>
    %c8 = arith.constant 8 : index
    %c0_6 = arith.constant 0 : index
    %15 = vector.load %arg5[%c8, %c0_6] : memref<32x256xbf16, #tpu.memory_space<vmem>>, vector<8x256xbf16>
    %16 = vector.extract_strided_slice %4 {offsets = [1, 0], sizes = [24, 8], strides = [1, 1]} : vector<32x8xf32> to vector<24x8xf32>
    %17 = arith.truncf %16 : vector<24x8xf32> to vector<24x8xbf16>
    %18 = vector.extract_strided_slice %7 {offsets = [1, 0], sizes = [24, 8], strides = [1, 1]} : vector<32x8xf32> to vector<24x8xf32>
    %19 = arith.truncf %18 : vector<24x8xf32> to vector<24x8xbf16>
    %cst_7 = arith.constant dense<0.000000e+00> : vector<24x256xf32>
    %20 = tpu.matmul %17, %15, %cst_7 {dimension_numbers = #tpu.dot_dimension_numbers<[1], [0], [0], [1], [0, 0, 1, 1], [], []>} : vector<24x8xbf16>, vector<8x256xbf16>, vector<24x256xf32> -> vector<24x256xf32>
    %cst_8 = arith.constant dense<0.000000e+00> : vector<24x256xf32>
    %21 = tpu.matmul %19, %15, %cst_8 {dimension_numbers = #tpu.dot_dimension_numbers<[1], [0], [0], [1], [0, 0, 1, 1], [], []>} : vector<24x8xbf16>, vector<8x256xbf16>, vector<24x256xf32> -> vector<24x256xf32>
    %22 = arith.addf %13, %20 : vector<24x256xf32>
    %23 = arith.addf %14, %21 : vector<24x256xf32>
    %c16 = arith.constant 16 : index
    %c0_9 = arith.constant 0 : index
    %24 = vector.load %arg5[%c16, %c0_9] : memref<32x256xbf16, #tpu.memory_space<vmem>>, vector<8x256xbf16>
    %25 = vector.extract_strided_slice %4 {offsets = [2, 0], sizes = [24, 8], strides = [1, 1]} : vector<32x8xf32> to vector<24x8xf32>
    %26 = arith.truncf %25 : vector<24x8xf32> to vector<24x8xbf16>
    %27 = vector.extract_strided_slice %7 {offsets = [2, 0], sizes = [24, 8], strides = [1, 1]} : vector<32x8xf32> to vector<24x8xf32>
    %28 = arith.truncf %27 : vector<24x8xf32> to vector<24x8xbf16>
    %cst_10 = arith.constant dense<0.000000e+00> : vector<24x256xf32>
    %29 = tpu.matmul %26, %24, %cst_10 {dimension_numbers = #tpu.dot_dimension_numbers<[1], [0], [0], [1], [0, 0, 1, 1], [], []>} : vector<24x8xbf16>, vector<8x256xbf16>, vector<24x256xf32> -> vector<24x256xf32>
    %cst_11 = arith.constant dense<0.000000e+00> : vector<24x256xf32>
    %30 = tpu.matmul %28, %24, %cst_11 {dimension_numbers = #tpu.dot_dimension_numbers<[1], [0], [0], [1], [0, 0, 1, 1], [], []>} : vector<24x8xbf16>, vector<8x256xbf16>, vector<24x256xf32> -> vector<24x256xf32>
    %31 = arith.addf %22, %29 : vector<24x256xf32>
    %32 = arith.addf %23, %30 : vector<24x256xf32>
    %c24 = arith.constant 24 : index
    %c0_12 = arith.constant 0 : index
    %33 = vector.load %arg5[%c24, %c0_12] : memref<32x256xbf16, #tpu.memory_space<vmem>>, vector<8x256xbf16>
    %34 = vector.extract_strided_slice %4 {offsets = [3, 0], sizes = [24, 8], strides = [1, 1]} : vector<32x8xf32> to vector<24x8xf32>
    %35 = arith.truncf %34 : vector<24x8xf32> to vector<24x8xbf16>
    %36 = vector.extract_strided_slice %7 {offsets = [3, 0], sizes = [24, 8], strides = [1, 1]} : vector<32x8xf32> to vector<24x8xf32>
    %37 = arith.truncf %36 : vector<24x8xf32> to vector<24x8xbf16>
    %cst_13 = arith.constant dense<0.000000e+00> : vector<24x256xf32>
    %38 = tpu.matmul %35, %33, %cst_13 {dimension_numbers = #tpu.dot_dimension_numbers<[1], [0], [0], [1], [0, 0, 1, 1], [], []>} : vector<24x8xbf16>, vector<8x256xbf16>, vector<24x256xf32> -> vector<24x256xf32>
    %cst_14 = arith.constant dense<0.000000e+00> : vector<24x256xf32>
    %39 = tpu.matmul %37, %33, %cst_14 {dimension_numbers = #tpu.dot_dimension_numbers<[1], [0], [0], [1], [0, 0, 1, 1], [], []>} : vector<24x8xbf16>, vector<8x256xbf16>, vector<24x256xf32> -> vector<24x256xf32>
    %40 = arith.addf %31, %38 : vector<24x256xf32>
    %41 = arith.addf %32, %39 : vector<24x256xf32>
    %42 = vector.extract_strided_slice %40 {offsets = [0, 1], sizes = [24, 127], strides = [1, 1]} : vector<24x256xf32> to vector<24x127xf32>
    %43 = arith.mulf %42, %42 : vector<24x127xf32>
    %44 = vector.extract_strided_slice %40 {offsets = [0, 128], sizes = [24, 127], strides = [1, 1]} : vector<24x256xf32> to vector<24x127xf32>
    %45 = arith.mulf %44, %44 : vector<24x127xf32>
    %46 = arith.addf %43, %45 : vector<24x127xf32>
    %47 = math.sqrt %46 : vector<24x127xf32>
    %48 = vector.extract_strided_slice %40 {offsets = [0, 0], sizes = [24, 1], strides = [1, 1]} : vector<24x256xf32> to vector<24x1xf32>
    %49 = math.absf %48 : vector<24x1xf32>
    %50 = vector.extract_strided_slice %41 {offsets = [0, 1], sizes = [24, 127], strides = [1, 1]} : vector<24x256xf32> to vector<24x127xf32>
    %51 = arith.mulf %50, %50 : vector<24x127xf32>
    %52 = vector.extract_strided_slice %41 {offsets = [0, 128], sizes = [24, 127], strides = [1, 1]} : vector<24x256xf32> to vector<24x127xf32>
    %53 = arith.mulf %52, %52 : vector<24x127xf32>
    %54 = arith.addf %51, %53 : vector<24x127xf32>
    %55 = math.sqrt %54 : vector<24x127xf32>
    %56 = vector.extract_strided_slice %41 {offsets = [0, 0], sizes = [24, 1], strides = [1, 1]} : vector<24x256xf32> to vector<24x1xf32>
    %57 = math.absf %56 : vector<24x1xf32>
    %58 = arith.subf %47, %55 : vector<24x127xf32>
    %59 = arith.subf %49, %57 : vector<24x1xf32>
    %60 = arith.mulf %58, %58 : vector<24x127xf32>
    %cst_15 = arith.constant dense<0.000000e+00> : vector<24xf32>
    %61 = vector.multi_reduction <add>, %60, %cst_15 [1] : vector<24x127xf32> to vector<24xf32>
    %62 = vector.shape_cast %61 : vector<24xf32> to vector<24x1xf32>
    %63 = arith.mulf %59, %59 : vector<24x1xf32>
    %64 = arith.addf %62, %63 : vector<24x1xf32>
    %c0_16 = arith.constant 0 : index
    %c0_17 = arith.constant 0 : index
    %c0_18 = arith.constant 0 : index
    %65 = vector.load %arg4[%c0_16, %c0_17, %c0_18] : memref<1x24x1xf32, #tpu.memory_space<vmem>>, vector<1x24x1xf32>
    %66 = vector.shape_cast %65 : vector<1x24x1xf32> to vector<24x1xf32>
    %67 = arith.mulf %64, %66 : vector<24x1xf32>
    %68 = vector.shape_cast %67 : vector<24x1xf32> to vector<1x24x1xf32>
    %cst_19 = arith.constant dense<0.000000e+00> : vector<1xf32>
    %69 = vector.multi_reduction <add>, %68, %cst_19 [1, 2] : vector<1x24x1xf32> to vector<1xf32>
    %70 = vector.shape_cast %69 : vector<1xf32> to vector<1x1x1xf32>
    %71 = vector.extract %70[0, 0, 0] : f32 from vector<1x1x1xf32>
    %72 = vector.broadcast %71 : f32 to vector<1x1x8x128xf32>
    %c0_20 = arith.constant 0 : index
    %c0_21 = arith.constant 0 : index
    %c0_22 = arith.constant 0 : index
    %c0_23 = arith.constant 0 : index
    %73 = vector.load %arg6[%c0_20, %c0_21, %c0_22, %c0_23] : memref<1x1x8x128xf32, #tpu.memory_space<vmem>>, vector<1x1x8x128xf32>
    tpu.vector_store %arg6[%c0_20, %c0_21, %c0_22, %c0_23], %72 {strides = array<i32>} : memref<1x1x8x128xf32, #tpu.memory_space<vmem>>, vector<1x1x8x128xf32>,
    return
  }
  func.func @transform_0(%arg0: i32, %arg1: i32) -> (i32, i32, i32) {
    %c0_i32 = arith.constant 0 : i32
    %c0_i32_0 = arith.constant 0 : i32
    %c0_i32_1 = arith.constant 0 : i32
    return %arg0, %c0_i32, %c0_i32_0 : i32, i32, i32
  }
  func.func @transform_1(%arg0: i32, %arg1: i32) -> (i32, i32, i32) {
    %c0_i32 = arith.constant 0 : i32
    %c0_i32_0 = arith.constant 0 : i32
    %c0_i32_1 = arith.constant 0 : i32
    return %arg0, %c0_i32, %c0_i32_0 : i32, i32, i32
  }
  func.func @transform_2(%arg0: i32, %arg1: i32) -> (i32, i32, i32) {
    %c0_i32 = arith.constant 0 : i32
    %c0_i32_0 = arith.constant 0 : i32
    return %arg0, %arg1, %c0_i32 : i32, i32, i32
  }
  func.func @transform_3(%arg0: i32, %arg1: i32) -> (i32, i32) {
    %c0_i32 = arith.constant 0 : i32
    %c0_i32_0 = arith.constant 0 : i32
    %c0_i32_1 = arith.constant 0 : i32
    return %c0_i32, %c0_i32_0 : i32, i32
  }
  func.func @transform_4(%arg0: i32, %arg1: i32) -> (i32, i32, i32, i32) {
    %c0_i32 = arith.constant 0 : i32
    %c0_i32_0 = arith.constant 0 : i32
    %c0_i32_1 = arith.constant 0 : i32
    return %arg0, %arg1, %c0_i32, %c0_i32_0 : i32, i32, i32, i32
  }
}

module attributes {stable_mosaic.version = 11 : i64} {
  func.func @kernel(%arg0: i32, %arg1: i32, %arg2: memref<1x24x16xf32, #tpu.memory_space<vmem>>, %arg3: memref<1x24x16xf32, #tpu.memory_space<vmem>>, %arg4: memref<1x16x1xf32, #tpu.memory_space<vmem>>, %arg5: memref<64x256xbf16, #tpu.memory_space<vmem>>, %arg6: memref<1x1x8x128xf32, #tpu.memory_space<vmem>>) attributes {dimension_semantics = [#tpu.dimension_semantics<parallel>, #tpu.dimension_semantics<parallel>], iteration_bounds = array<i64: 2, 1>, scalar_prefetch = 0 : i64, scratch_operands = 0 : i64, tpu.core_type = #tpu.core_type<tc>, window_params = [{transform_indices = @transform_0, window_bounds = array<i64: 1, 24, 16>}, {transform_indices = @transform_1, window_bounds = array<i64: 1, 24, 16>}, {transform_indices = @transform_2, window_bounds = array<i64: 1, 16, 1>}, {pipeline_mode = #tpu.pipeline_mode<synchronous>, transform_indices = @transform_3, window_bounds = array<i64: 64, 256>}, {transform_indices = @transform_4, window_bounds = array<i64: 1, 1, 8, 128>}]} {
    %c16_i32 = arith.constant 16 : i32
    %0 = arith.muli %arg1, %c16_i32 : i32
    %1 = tpu.assume_multiple %0, 8 : i32
    %c0 = arith.constant 0 : index
    %2 = arith.index_cast %1 : i32 to index
    %c0_0 = arith.constant 0 : index
    %3 = vector.load %arg2[%c0, %2, %c0_0] : memref<1x24x16xf32, #tpu.memory_space<vmem>>, vector<1x24x16xf32>
    %4 = vector.shape_cast %3 : vector<1x24x16xf32> to vector<24x16xf32>
    %c0_1 = arith.constant 0 : index
    %5 = arith.index_cast %1 : i32 to index
    %c0_2 = arith.constant 0 : index
    %6 = vector.load %arg3[%c0_1, %5, %c0_2] : memref<1x24x16xf32, #tpu.memory_space<vmem>>, vector<1x24x16xf32>
    %7 = vector.shape_cast %6 : vector<1x24x16xf32> to vector<24x16xf32>
    %c0_3 = arith.constant 0 : index
    %c0_4 = arith.constant 0 : index
    %8 = vector.load %arg5[%c0_3, %c0_4] : memref<64x256xbf16, #tpu.memory_space<vmem>>, vector<16x256xbf16>
    %9 = vector.extract_strided_slice %4 {offsets = [0, 0], sizes = [16, 16], strides = [1, 1]} : vector<24x16xf32> to vector<16x16xf32>
    %10 = arith.truncf %9 : vector<16x16xf32> to vector<16x16xbf16>
    %11 = vector.extract_strided_slice %7 {offsets = [0, 0], sizes = [16, 16], strides = [1, 1]} : vector<24x16xf32> to vector<16x16xf32>
    %12 = arith.truncf %11 : vector<16x16xf32> to vector<16x16xbf16>
    %cst = arith.constant dense<0.000000e+00> : vector<16x256xf32>
    %13 = tpu.matmul %10, %8, %cst {dimension_numbers = #tpu.dot_dimension_numbers<[1], [0], [0], [1], [0, 0, 1, 1], [], []>} : vector<16x16xbf16>, vector<16x256xbf16>, vector<16x256xf32> -> vector<16x256xf32>
    %cst_5 = arith.constant dense<0.000000e+00> : vector<16x256xf32>
    %14 = tpu.matmul %12, %8, %cst_5 {dimension_numbers = #tpu.dot_dimension_numbers<[1], [0], [0], [1], [0, 0, 1, 1], [], []>} : vector<16x16xbf16>, vector<16x256xbf16>, vector<16x256xf32> -> vector<16x256xf32>
    %c16 = arith.constant 16 : index
    %c0_6 = arith.constant 0 : index
    %15 = vector.load %arg5[%c16, %c0_6] : memref<64x256xbf16, #tpu.memory_space<vmem>>, vector<16x256xbf16>
    %16 = vector.extract_strided_slice %4 {offsets = [1, 0], sizes = [16, 16], strides = [1, 1]} : vector<24x16xf32> to vector<16x16xf32>
    %17 = arith.truncf %16 : vector<16x16xf32> to vector<16x16xbf16>
    %18 = vector.extract_strided_slice %7 {offsets = [1, 0], sizes = [16, 16], strides = [1, 1]} : vector<24x16xf32> to vector<16x16xf32>
    %19 = arith.truncf %18 : vector<16x16xf32> to vector<16x16xbf16>
    %cst_7 = arith.constant dense<0.000000e+00> : vector<16x256xf32>
    %20 = tpu.matmul %17, %15, %cst_7 {dimension_numbers = #tpu.dot_dimension_numbers<[1], [0], [0], [1], [0, 0, 1, 1], [], []>} : vector<16x16xbf16>, vector<16x256xbf16>, vector<16x256xf32> -> vector<16x256xf32>
    %cst_8 = arith.constant dense<0.000000e+00> : vector<16x256xf32>
    %21 = tpu.matmul %19, %15, %cst_8 {dimension_numbers = #tpu.dot_dimension_numbers<[1], [0], [0], [1], [0, 0, 1, 1], [], []>} : vector<16x16xbf16>, vector<16x256xbf16>, vector<16x256xf32> -> vector<16x256xf32>
    %22 = arith.addf %13, %20 : vector<16x256xf32>
    %23 = arith.addf %14, %21 : vector<16x256xf32>
    %c32 = arith.constant 32 : index
    %c0_9 = arith.constant 0 : index
    %24 = vector.load %arg5[%c32, %c0_9] : memref<64x256xbf16, #tpu.memory_space<vmem>>, vector<16x256xbf16>
    %25 = vector.extract_strided_slice %4 {offsets = [2, 0], sizes = [16, 16], strides = [1, 1]} : vector<24x16xf32> to vector<16x16xf32>
    %26 = arith.truncf %25 : vector<16x16xf32> to vector<16x16xbf16>
    %27 = vector.extract_strided_slice %7 {offsets = [2, 0], sizes = [16, 16], strides = [1, 1]} : vector<24x16xf32> to vector<16x16xf32>
    %28 = arith.truncf %27 : vector<16x16xf32> to vector<16x16xbf16>
    %cst_10 = arith.constant dense<0.000000e+00> : vector<16x256xf32>
    %29 = tpu.matmul %26, %24, %cst_10 {dimension_numbers = #tpu.dot_dimension_numbers<[1], [0], [0], [1], [0, 0, 1, 1], [], []>} : vector<16x16xbf16>, vector<16x256xbf16>, vector<16x256xf32> -> vector<16x256xf32>
    %cst_11 = arith.constant dense<0.000000e+00> : vector<16x256xf32>
    %30 = tpu.matmul %28, %24, %cst_11 {dimension_numbers = #tpu.dot_dimension_numbers<[1], [0], [0], [1], [0, 0, 1, 1], [], []>} : vector<16x16xbf16>, vector<16x256xbf16>, vector<16x256xf32> -> vector<16x256xf32>
    %31 = arith.addf %22, %29 : vector<16x256xf32>
    %32 = arith.addf %23, %30 : vector<16x256xf32>
    %c48 = arith.constant 48 : index
    %c0_12 = arith.constant 0 : index
    %33 = vector.load %arg5[%c48, %c0_12] : memref<64x256xbf16, #tpu.memory_space<vmem>>, vector<16x256xbf16>
    %34 = vector.extract_strided_slice %4 {offsets = [3, 0], sizes = [16, 16], strides = [1, 1]} : vector<24x16xf32> to vector<16x16xf32>
    %35 = arith.truncf %34 : vector<16x16xf32> to vector<16x16xbf16>
    %36 = vector.extract_strided_slice %7 {offsets = [3, 0], sizes = [16, 16], strides = [1, 1]} : vector<24x16xf32> to vector<16x16xf32>
    %37 = arith.truncf %36 : vector<16x16xf32> to vector<16x16xbf16>
    %cst_13 = arith.constant dense<0.000000e+00> : vector<16x256xf32>
    %38 = tpu.matmul %35, %33, %cst_13 {dimension_numbers = #tpu.dot_dimension_numbers<[1], [0], [0], [1], [0, 0, 1, 1], [], []>} : vector<16x16xbf16>, vector<16x256xbf16>, vector<16x256xf32> -> vector<16x256xf32>
    %cst_14 = arith.constant dense<0.000000e+00> : vector<16x256xf32>
    %39 = tpu.matmul %37, %33, %cst_14 {dimension_numbers = #tpu.dot_dimension_numbers<[1], [0], [0], [1], [0, 0, 1, 1], [], []>} : vector<16x16xbf16>, vector<16x256xbf16>, vector<16x256xf32> -> vector<16x256xf32>
    %40 = arith.addf %31, %38 : vector<16x256xf32>
    %41 = arith.addf %32, %39 : vector<16x256xf32>
    %42 = vector.extract_strided_slice %40 {offsets = [0, 1], sizes = [16, 127], strides = [1, 1]} : vector<16x256xf32> to vector<16x127xf32>
    %43 = arith.mulf %42, %42 : vector<16x127xf32>
    %44 = vector.extract_strided_slice %40 {offsets = [0, 128], sizes = [16, 127], strides = [1, 1]} : vector<16x256xf32> to vector<16x127xf32>
    %45 = arith.mulf %44, %44 : vector<16x127xf32>
    %46 = arith.addf %43, %45 : vector<16x127xf32>
    %47 = math.sqrt %46 : vector<16x127xf32>
    %48 = vector.extract_strided_slice %40 {offsets = [0, 0], sizes = [16, 1], strides = [1, 1]} : vector<16x256xf32> to vector<16x1xf32>
    %49 = math.absf %48 : vector<16x1xf32>
    %50 = vector.extract_strided_slice %41 {offsets = [0, 1], sizes = [16, 127], strides = [1, 1]} : vector<16x256xf32> to vector<16x127xf32>
    %51 = arith.mulf %50, %50 : vector<16x127xf32>
    %52 = vector.extract_strided_slice %41 {offsets = [0, 128], sizes = [16, 127], strides = [1, 1]} : vector<16x256xf32> to vector<16x127xf32>
    %53 = arith.mulf %52, %52 : vector<16x127xf32>
    %54 = arith.addf %51, %53 : vector<16x127xf32>
    %55 = math.sqrt %54 : vector<16x127xf32>
    %56 = vector.extract_strided_slice %41 {offsets = [0, 0], sizes = [16, 1], strides = [1, 1]} : vector<16x256xf32> to vector<16x1xf32>
    %57 = math.absf %56 : vector<16x1xf32>
    %58 = arith.subf %47, %55 : vector<16x127xf32>
    %59 = arith.subf %49, %57 : vector<16x1xf32>
    %60 = arith.mulf %58, %58 : vector<16x127xf32>
    %cst_15 = arith.constant dense<0.000000e+00> : vector<16xf32>
    %61 = vector.multi_reduction <add>, %60, %cst_15 [1] : vector<16x127xf32> to vector<16xf32>
    %62 = vector.shape_cast %61 : vector<16xf32> to vector<16x1xf32>
    %63 = arith.mulf %59, %59 : vector<16x1xf32>
    %64 = arith.addf %62, %63 : vector<16x1xf32>
    %c0_16 = arith.constant 0 : index
    %c0_17 = arith.constant 0 : index
    %c0_18 = arith.constant 0 : index
    %65 = vector.load %arg4[%c0_16, %c0_17, %c0_18] : memref<1x16x1xf32, #tpu.memory_space<vmem>>, vector<1x16x1xf32>
    %66 = vector.shape_cast %65 : vector<1x16x1xf32> to vector<16x1xf32>
    %67 = arith.mulf %64, %66 : vector<16x1xf32>
    %68 = vector.shape_cast %67 : vector<16x1xf32> to vector<1x16x1xf32>
    %cst_19 = arith.constant dense<0.000000e+00> : vector<1xf32>
    %69 = vector.multi_reduction <add>, %68, %cst_19 [1, 2] : vector<1x16x1xf32> to vector<1xf32>
    %70 = vector.shape_cast %69 : vector<1xf32> to vector<1x1x1xf32>
    %71 = vector.extract %70[0, 0, 0] : f32 from vector<1x1x1xf32>
    %72 = vector.broadcast %71 : f32 to vector<1x1x8x128xf32>
    %c0_20 = arith.constant 0 : index
    %c0_21 = arith.constant 0 : index
    %c0_22 = arith.constant 0 : index
    %c0_23 = arith.constant 0 : index
    %73 = vector.load %arg6[%c0_20, %c0_21, %c0_22, %c0_23] : memref<1x1x8x128xf32, #tpu.memory_space<vmem>>, vector<1x1x8x128xf32>
    tpu.vector_store %arg6[%c0_20, %c0_21, %c0_22, %c0_23], %72 {strides = array<i32>} : memref<1x1x8x128xf32, #tpu.memory_space<vmem>>, vector<1x1x8x128xf32>,
    return
  }
  func.func @transform_0(%arg0: i32, %arg1: i32) -> (i32, i32, i32) {
    %c0_i32 = arith.constant 0 : i32
    %c0_i32_0 = arith.constant 0 : i32
    %c0_i32_1 = arith.constant 0 : i32
    return %arg0, %c0_i32, %c0_i32_0 : i32, i32, i32
  }
  func.func @transform_1(%arg0: i32, %arg1: i32) -> (i32, i32, i32) {
    %c0_i32 = arith.constant 0 : i32
    %c0_i32_0 = arith.constant 0 : i32
    %c0_i32_1 = arith.constant 0 : i32
    return %arg0, %c0_i32, %c0_i32_0 : i32, i32, i32
  }
  func.func @transform_2(%arg0: i32, %arg1: i32) -> (i32, i32, i32) {
    %c0_i32 = arith.constant 0 : i32
    %c0_i32_0 = arith.constant 0 : i32
    return %arg0, %arg1, %c0_i32 : i32, i32, i32
  }
  func.func @transform_3(%arg0: i32, %arg1: i32) -> (i32, i32) {
    %c0_i32 = arith.constant 0 : i32
    %c0_i32_0 = arith.constant 0 : i32
    %c0_i32_1 = arith.constant 0 : i32
    return %c0_i32, %c0_i32_0 : i32, i32
  }
  func.func @transform_4(%arg0: i32, %arg1: i32) -> (i32, i32, i32, i32) {
    %c0_i32 = arith.constant 0 : i32
    %c0_i32_0 = arith.constant 0 : i32
    %c0_i32_1 = arith.constant 0 : i32
    return %arg0, %arg1, %c0_i32, %c0_i32_0 : i32, i32, i32, i32
  }
}

</mosaic_0001>

<llo_original>
// kernel: a_call__.2
$region0: #{a_call__.2}
  #allocation0 [shape = 'u32[]', space=smem, size = 0x4, offset = 0x4, fixed_abs, tag = 'smem constant byte address 0x4 - core index']
  #allocation1 [shape = 'u32[72,128]{1,0:T(1,128)}', space=vmem, size = 0x9000, scoped, tag = 'internal scratch']
  %s0 = inlined_call_operand.vmem [shape: f32[2,32,8], index: 0, kind: input, shape index: {}]
  %s1 = inlined_call_operand.vmem [shape: f32[2,32,8], index: 1, kind: input, shape index: {}]
  %s2 = inlined_call_operand.vmem [shape: f32[2,24,1], index: 2, kind: input, shape index: {}]
  %s3 = inlined_call_operand.vmem [shape: bf16[32,256], index: 3, kind: input, shape index: {}]
  %s4 = inlined_call_operand.vmem [shape: f32[2,1,8,128], index: 4, kind: output, shape index: {}]
  %s5 = sld [smem:[#allocation0]]
  $region49: #{a_call__.2} parent=0
    _
  %s7 = ssub.s32 1, %s5
  %s8 = scalar_select 0, %s7, %s5
  loop: start=0, step=1, limit=4
  $region2: #{a_call__.2} parent=0 // loop_pre_header
    _
  $region3: #{a_call__.2} parent=0 // loop_header
    %s10 = sphi 0, %s14
    %p11 = scmp.ge.s32.totalorder %s10, 4
    %s17 = sphi 0, %s29
    %s18 = sphi 0, %s25
    %s19 = sphi 0, %s17
    %s20 = sphi 0, %s18
    %s21 = sphi 0, %s19
    %s22 = sphi 0, %s20
    %s32 = sphi 0, %s34
    %s35 = sphi 0, %s32
    %s36 = sphi 0, %s35
    %s52 = sphi 0, %s36
    %s58 = sphi 0, %s60
    %s61 = sphi 0, %s58
    %s62 = sphi 0, %s61
    %s78 = sphi 0, %s62
    %s86 = sphi 0, %s88
    %s89 = sphi 0, %s86
    %s90 = sphi 0, %s89
    %s106 = sphi 0, %s90
    %s110 = sphi 0, %s110
    %s112 = sphi 0, %s110
    %s113 = sphi 0, %s112
    %s127 = sphi 0, %s113
    %s135 = sphi 0, %s137
    %s138 = sphi 0, %s135
    %s139 = sphi 0, %s138
    %s155 = sphi 0, %s139
  $region4: #{a_call__.2} parent=0 // loop_header_branch
    %13 = sbr.rel (%p11) target = $region8
  $region5: #{a_call__.2} parent=0 // loop_body
    %s15 = ssub.s32 %s10, 1
    %s16 = ssub.s32 %s10, 2
    %s23 = sadd.s32 1, %s18
    %p24 = scmp.ge.s32.totalorder %s23, 1
    %s25 = scalar_select %p24, 0, %s23
    %s26 = sadd.s32 1, %s17
    %s27 = scalar_select %p24, %s26, %s17
    %p28 = scmp.ge.s32.totalorder %s27, 2
    %s29 = scalar_select %p28, 0, %s27
    %s30 = ssub.s32 %s17, %s29
    %p31 = scmp.eq.s32.totalorder %s30, 0
    %s33 = sadd.s32 %s32, 1
    %s34 = scalar_select %p31, %s32, %s33
    %p37 = pneg %p31
    %p38 = scmp.eq.s32.totalorder %s10, 1
    %p39 = por %p37, %p38
    %p40 = scmp.ne.s32.totalorder %s32, %s35
    %p41 = scmp.eq.s32.totalorder %s10, 0
    %p42 = por %p40, %p41
    %p43 = scmp.ne.s32.totalorder %s32, %s35
    %p44 = scmp.eq.s32.totalorder %s15, 1
    %p45 = por %p43, %p44
    %p46 = scmp.ne.s32.totalorder %s35, %s36
    %p47 = scmp.eq.s32.totalorder %s15, 0
    %p48 = por %p46, %p47
    %p49 = scmp.ne.s32.totalorder %s35, %s36
    %p50 = scmp.eq.s32.totalorder %s16, 1
    %p51 = por %p49, %p50
    %p53 = scmp.ne.s32.totalorder %s36, %s52
    %p54 = scmp.eq.s32.totalorder %s16, 0
    %p55 = por %p53, %p54
    %s56 = ssub.s32 %s17, %s29
    %p57 = scmp.eq.s32.totalorder %s56, 0
    %s59 = sadd.s32 %s58, 1
    %s60 = scalar_select %p57, %s58, %s59
    %p63 = pneg %p57
    %p64 = scmp.eq.s32.totalorder %s10, 1
    %p65 = por %p63, %p64
    %p66 = scmp.ne.s32.totalorder %s58, %s61
    %p67 = scmp.eq.s32.totalorder %s10, 0
    %p68 = por %p66, %p67
    %p69 = scmp.ne.s32.totalorder %s58, %s61
    %p70 = scmp.eq.s32.totalorder %s15, 1
    %p71 = por %p69, %p70
    %p72 = scmp.ne.s32.totalorder %s61, %s62
    %p73 = scmp.eq.s32.totalorder %s15, 0
    %p74 = por %p72, %p73
    %p75 = scmp.ne.s32.totalorder %s61, %s62
    %p76 = scmp.eq.s32.totalorder %s16, 1
    %p77 = por %p75, %p76
    %p79 = scmp.ne.s32.totalorder %s62, %s78
    %p80 = scmp.eq.s32.totalorder %s16, 0
    %p81 = por %p79, %p80
    %s82 = ssub.s32 %s17, %s29
    %s83 = ssub.s32 %s18, %s25
    %s84 = sor.u32 %s82, %s83
    %p85 = scmp.eq.s32.totalorder %s84, 0
    %s87 = sadd.s32 %s86, 1
    %s88 = scalar_select %p85, %s86, %s87
    %p91 = pneg %p85
    %p92 = scmp.eq.s32.totalorder %s10, 1
    %p93 = por %p91, %p92
    %p94 = scmp.ne.s32.totalorder %s86, %s89
    %p95 = scmp.eq.s32.totalorder %s10, 0
    %p96 = por %p94, %p95
    %p97 = scmp.ne.s32.totalorder %s86, %s89
    %p98 = scmp.eq.s32.totalorder %s15, 1
    %p99 = por %p97, %p98
    %p100 = scmp.ne.s32.totalorder %s89, %s90
    %p101 = scmp.eq.s32.totalorder %s15, 0
    %p102 = por %p100, %p101
    %p103 = scmp.ne.s32.totalorder %s89, %s90
    %p104 = scmp.eq.s32.totalorder %s16, 1
    %p105 = por %p103, %p104
    %p107 = scmp.ne.s32.totalorder %s90, %s106
    %p108 = scmp.eq.s32.totalorder %s16, 0
    %p109 = por %p107, %p108
    %s111 = sadd.s32 %s110, 1
    %p114 = scmp.eq.s32.totalorder %s10, 1
    %p115 = scmp.ne.s32.totalorder %s110, %s112
    %p116 = scmp.eq.s32.totalorder %s10, 0
    %p117 = por %p115, %p116
    %p118 = scmp.ne.s32.totalorder %s110, %s112
    %p119 = scmp.eq.s32.totalorder %s15, 1
    %p120 = por %p118, %p119
    %p121 = scmp.ne.s32.totalorder %s112, %s113
    %p122 = scmp.eq.s32.totalorder %s15, 0
    %p123 = por %p121, %p122
    %p124 = scmp.ne.s32.totalorder %s112, %s113
    %p125 = scmp.eq.s32.totalorder %s16, 1
    %p126 = por %p124, %p125
    %p128 = scmp.ne.s32.totalorder %s113, %s127
    %p129 = scmp.eq.s32.totalorder %s16, 0
    %p130 = por %p128, %p129
    %s131 = ssub.s32 %s17, %s29
    %s132 = ssub.s32 %s18, %s25
    %s133 = sor.u32 %s131, %s132
    %p134 = scmp.eq.s32.totalorder %s133, 0
    %s136 = sadd.s32 %s135, 1
    %s137 = scalar_select %p134, %s135, %s136
    %p140 = pneg %p134
    %p141 = scmp.eq.s32.totalorder %s10, 1
    %p142 = por %p140, %p141
    %p143 = scmp.ne.s32.totalorder %s135, %s138
    %p144 = scmp.eq.s32.totalorder %s10, 0
    %p145 = por %p143, %p144
    %p146 = scmp.ne.s32.totalorder %s135, %s138
    %p147 = scmp.eq.s32.totalorder %s15, 1
    %p148 = por %p146, %p147
    %p149 = scmp.ne.s32.totalorder %s138, %s139
    %p150 = scmp.eq.s32.totalorder %s15, 0
    %p151 = por %p149, %p150
    %p152 = scmp.ne.s32.totalorder %s138, %s139
    %p153 = scmp.eq.s32.totalorder %s16, 1
    %p154 = por %p152, %p153
    %p156 = scmp.ne.s32.totalorder %s139, %s155
    %p157 = scmp.eq.s32.totalorder %s16, 0
    %p158 = por %p156, %p157
    %p159 = scmp.le.s32.totalorder 1, %s10
    %p160 = scmp.lt.s32.totalorder %s10, 3
    %p161 = pnand %p159, %p160
    %p162 = pneg %p161
    // Predicated region
    $region9: #{a_call__.2} parent=5 // pred_check
      _
    $region10: #{a_call__.2} parent=5 // pred_check_branch
      %164 = sbr.rel (%p161) target = $region12
    $region11: #{a_call__.2} parent=5 // pred_region
      %s165 = ssub.s32 %s10, 1
      // Predicated region
      $region13: #{a_call__.2} parent=11 // pred_check
        %p166 = pneg %p123
      $region14: #{a_call__.2} parent=11 // pred_check_branch
        %168 = sbr.rel (%p166) target = $region16
      $region15: #{a_call__.2} parent=11 // pred_region
        _
      $region16: #{a_call__.2} parent=11 // pred_fallthru
        _
    $region12: #{a_call__.2} parent=5 // pred_fallthru
      _
    %p169 = scmp.lt.s32.totalorder %s10, 2
    // Predicated region
    $region17: #{a_call__.2} parent=5 // pred_check
      %p170 = pneg %p169
    $region18: #{a_call__.2} parent=5 // pred_check_branch
      %172 = sbr.rel (%p170) target = $region20
    $region19: #{a_call__.2} parent=5 // pred_region
      // Predicated region
      $region21: #{a_call__.2} parent=19 // pred_check
        %p173 = pneg %p42
      $region22: #{a_call__.2} parent=19 // pred_check_branch
        %175 = sbr.rel (%p173) target = $region24
      $region23: #{a_call__.2} parent=19 // pred_region
        %p176 = scmp.lt.s32.totalorder %s17, 1
        %s177 = scalar_select %p176, %s17, 1
        %s178 = smul.addr %s177, 4
        %s179 = smul.addr %s178, 8
        %s180 = scalar_lea.vmem %s0, %s179
      $region24: #{a_call__.2} parent=19 // pred_fallthru
        _
      // Predicated region
      $region25: #{a_call__.2} parent=19 // pred_check
        %p181 = pneg %p68
      $region26: #{a_call__.2} parent=19 // pred_check_branch
        %183 = sbr.rel (%p181) target = $region28
      $region27: #{a_call__.2} parent=19 // pred_region
        %p184 = scmp.lt.s32.totalorder %s17, 1
        %s185 = scalar_select %p184, %s17, 1
        %s186 = smul.addr %s185, 4
        %s187 = smul.addr %s186, 8
        %s188 = scalar_lea.vmem %s1, %s187
      $region28: #{a_call__.2} parent=19 // pred_fallthru
        _
      // Predicated region
      $region29: #{a_call__.2} parent=19 // pred_check
        %p189 = pneg %p96
      $region30: #{a_call__.2} parent=19 // pred_check_branch
        %191 = sbr.rel (%p189) target = $region32
      $region31: #{a_call__.2} parent=19 // pred_region
        %s192 = smul.u32 3, %s18
        %p193 = scmp.lt.s32.totalorder %s17, 1
        %s194 = scalar_select %p193, %s17, 1
        %p195 = scmp.lt.s32.totalorder %s192, 2
        %s196 = scalar_select %p195, %s192, 2
        %s197 = smul.addr %s194, 3
        %s198 = sadd.s32 %s196, %s197
        %s199 = smul.addr %s198, 8
        %s200 = scalar_lea.vmem %s2, %s199
        %s201 = smul.u32 3, %s18
      $region32: #{a_call__.2} parent=19 // pred_fallthru
        _
    $region20: #{a_call__.2} parent=5 // pred_fallthru
      _
    %p202 = scmp.le.s32.totalorder 1, %s10
    %p203 = scmp.lt.s32.totalorder %s10, 3
    %p204 = pnand %p202, %p203
    %p205 = pneg %p204
    // Predicated region
    $region33: #{a_call__.2} parent=5 // pred_check
      _
    $region34: #{a_call__.2} parent=5 // pred_check_branch
      %207 = sbr.rel (%p204) target = $region36
    $region35: #{a_call__.2} parent=5 // pred_region
      %s208 = ssub.s32 %s10, 1
      %p209 = scmp.lt.s32.totalorder %s19, 1
      %s210 = scalar_select %p209, %s19, 1
      %s211 = smul.addr %s210, 4
      %s212 = smul.addr %s211, 8
      %s213 = scalar_lea.vmem %s0, %s212
      %p214 = pneg %p48
      %p215 = pneg %p45
      %p216 = scmp.lt.s32.totalorder %s19, 1
      %s217 = scalar_select %p216, %s19, 1
      %s218 = smul.addr %s217, 4
      %s219 = smul.addr %s218, 8
      %s220 = scalar_lea.vmem %s1, %s219
      %p221 = pneg %p74
      %p222 = pneg %p71
      %s223 = smul.u32 3, %s20
      %p224 = scmp.lt.s32.totalorder %s19, 1
      %s225 = scalar_select %p224, %s19, 1
      %p226 = scmp.lt.s32.totalorder %s223, 2
      %s227 = scalar_select %p226, %s223, 2
      %s228 = smul.addr %s225, 3
      %s229 = sadd.s32 %s227, %s228
      %s230 = smul.addr %s229, 8
      %s231 = scalar_lea.vmem %s2, %s230
      %p232 = pneg %p102
      %p233 = pneg %p99
      %p234 = pneg %p123
      %p235 = pneg %p120
      %p236 = pneg %p151
      %p237 = pneg %p148
      %p238 = scmp.lt.s32.totalorder %s19, 1
      %s239 = scalar_select %p238, %s19, 1
      %p240 = scmp.lt.s32.totalorder %s20, 0
      %s241 = scalar_select %p240, %s20, 0
      %s242 = sadd.s32 %s241, %s239
      %s243 = smul.addr %s242, 8
      %s244 = scalar_lea.vmem %s4, %s243
      %p245 = scmp.lt.s32.totalorder %s19, 1
      %s246 = scalar_select %p245, %s19, 1
      %s247 = smul.addr %s246, 4
      %s248 = smul.addr %s247, 8
      %s249 = scalar_lea.vmem %s0, %s248
      %p250 = scmp.lt.s32.totalorder %s19, 1
      %s251 = scalar_select %p250, %s19, 1
      %s252 = smul.addr %s251, 4
      %s253 = smul.addr %s252, 8
      %s254 = scalar_lea.vmem %s1, %s253
      %s255 = smul.u32 3, %s20
      %p256 = scmp.lt.s32.totalorder %s19, 1
      %s257 = scalar_select %p256, %s19, 1
      %p258 = scmp.lt.s32.totalorder %s255, 2
      %s259 = scalar_select %p258, %s255, 2
      %s260 = smul.addr %s257, 3
      %s261 = sadd.s32 %s259, %s260
      %s262 = smul.addr %s261, 8
      %s263 = scalar_lea.vmem %s2, %s262
      %s264 = smul.u32 3, %s20
      %p265 = scmp.lt.s32.totalorder %s19, 1
      %s266 = scalar_select %p265, %s19, 1
      %p267 = scmp.lt.s32.totalorder %s20, 0
      %s268 = scalar_select %p267, %s20, 0
      %s269 = sadd.s32 %s268, %s266
      %s270 = smul.addr %s269, 8
      %s271 = scalar_lea.vmem %s4, %s270
      %s273 = smul.u32 %s20, 24
      %s274 = scalar_lea.vmem %s249, %s273
      %v275 = vld [vmem:[%s274] sm:$0xff]
      %v276 = vld [vmem:[%s274 + $0x8] sm:$0xff]
      %v277 = vld [vmem:[%s274 + $0x10] sm:$0xff]
      %v278 = vld [vmem:[%s274 + $0x18] sm:$0xff]
      %s279 = scalar_lea.vmem %s254, %s273
      %v280 = vld [vmem:[%s279] sm:$0xff]
      %v281 = vld [vmem:[%s279 + $0x8] sm:$0xff]
      %v282 = vld [vmem:[%s279 + $0x10] sm:$0xff]
      %v283 = vld [vmem:[%s279 + $0x18] sm:$0xff]
      %v284 = vld [vmem:[%s3] sm:$0xff]
      %v285 = vpack.c.bf16 %v276, %v275
      %v286 = vpack.c.bf16 %v277, %v277
      %v287 = vpack.c.bf16 %v281, %v280
      %v288 = vpack.c.bf16 %v282, %v282
      %v289 = vld [vmem:[%s3 + $0x8] sm:$0xff]
      %v290 = vpack.c.bf16 %v278, %v277
      %v291 = vpack.c.bf16 %v283, %v282
      %vm292 = vsmask.f32 7424
      %v294 = vshrl.u32 %v285, 16
      %v296 = vshll.u32 %v285, 16
      %v298 = vrot.slane %v296, 1
      %v299 = vor.u32 %v294, %v298
      %v301 = vshll.u32 %v290, 16
      %v303 = vrot.slane %v301, 1
      %v304 = vsel %vm292, %v299, %v303
      %v305 = vshrl.u32 %v290, 16
      %v307 = vor.u32 %v305, %v303
      %v309 = vunpack.c.l.b16 %v289
      %v310 = vunpack.c.h.b16 %v289
      %v311 = vpack.c.b16 %v309, %v309
      %v312 = vpack.c.b16 %v310, %v310
      %vm313 = vcmask 64512
      %v315 = vsel %vm313, %v304, 0
      %v318 = vsel %vm313, %v307, 0
      %vm320 = vcmask 1043456
      %v322 = vsel %vm320, %v311, 0
      %v325 = vsel %vm320, %v312, 0
      %327 = vmatpush.bf16.msra.mxu0 0
      %328 = vmatpush.bf16.msra.mxu0 0
      %329 = vmatpush.bf16.msra.mxu0 0
      %330 = vmatpush.bf16.msra.mxu0 0
      %331 = vmatpush.bf16.msra.mxu0 0
      %332 = vmatpush.bf16.msra.mxu0 0
      %333 = vmatpush.bf16.msra.mxu0 0
      %334 = vmatpush.bf16.msra.mxu0 %v322
      %335 = vmatmul.bf16.gmra.mxu0 %v315
      %v336 = vpop.f32.mrf.mxu0
      %v337 = vadd.f32 0.0, %v336
      %v338 = vpop.f32.mrf.mxu0
      %v339 = vadd.f32 0.0, %v338
      %340 = vmatmul.bf16.gmra.mxu0 %v318
      %v341 = vpop.f32.mrf.mxu0
      %v342 = vadd.f32 0.0, %v341
      %v343 = vpop.f32.mrf.mxu0
      %344 = vdwg.mxu0
      %345 = vmatpush.bf16.msra.mxu0 0
      %346 = vmatpush.bf16.msra.mxu0 0
      %347 = vmatpush.bf16.msra.mxu0 0
      %348 = vmatpush.bf16.msra.mxu0 0
      %349 = vmatpush.bf16.msra.mxu0 0
      %350 = vmatpush.bf16.msra.mxu0 0
      %351 = vmatpush.bf16.msra.mxu0 0
      %352 = vmatpush.bf16.msra.mxu0 %v325
      %353 = vmatmul.bf16.gmra.mxu0 %v315
      %v354 = vpop.f32.mrf.mxu0
      %v355 = vadd.f32 0.0, %v354
      %v356 = vpop.f32.mrf.mxu0
      %v357 = vadd.f32 0.0, %v356
      %358 = vmatmul.bf16.gmra.mxu0 %v318
      %v359 = vpop.f32.mrf.mxu0
      %v360 = vadd.f32 0.0, %v359
      %v361 = vpop.f32.mrf.mxu0
      %362 = vdwg.mxu0
      %v364 = vshrl.u32 %v287, 16
      %v366 = vshll.u32 %v287, 16
      %v368 = vrot.slane %v366, 1
      %v369 = vor.u32 %v364, %v368
      %v371 = vshll.u32 %v291, 16
      %v373 = vrot.slane %v371, 1
      %v374 = vsel %vm292, %v369, %v373
      %v375 = vshrl.u32 %v291, 16
      %v377 = vor.u32 %v375, %v373
      %v379 = vsel %vm313, %v374, 0
      %v382 = vsel %vm313, %v377, 0
      %384 = vmatpush.bf16.msra.mxu0 0
      %385 = vmatpush.bf16.msra.mxu0 0
      %386 = vmatpush.bf16.msra.mxu0 0
      %387 = vmatpush.bf16.msra.mxu0 0
      %388 = vmatpush.bf16.msra.mxu0 0
      %389 = vmatpush.bf16.msra.mxu0 0
      %390 = vmatpush.bf16.msra.mxu0 0
      %391 = vmatpush.bf16.msra.mxu0 %v322
      %392 = vmatmul.bf16.gmra.mxu0 %v379
      %v393 = vpop.f32.mrf.mxu0
      %v394 = vadd.f32 0.0, %v393
      %v395 = vpop.f32.mrf.mxu0
      %v396 = vadd.f32 0.0, %v395
      %397 = vmatmul.bf16.gmra.mxu0 %v382
      %v398 = vpop.f32.mrf.mxu0
      %v399 = vadd.f32 0.0, %v398
      %v400 = vpop.f32.mrf.mxu0
      %401 = vdwg.mxu0
      %402 = vmatpush.bf16.msra.mxu0 0
      %403 = vmatpush.bf16.msra.mxu0 0
      %404 = vmatpush.bf16.msra.mxu0 0
      %405 = vmatpush.bf16.msra.mxu0 0
      %406 = vmatpush.bf16.msra.mxu0 0
      %407 = vmatpush.bf16.msra.mxu0 0
      %408 = vmatpush.bf16.msra.mxu0 0
      %409 = vmatpush.bf16.msra.mxu0 %v325
      %410 = vmatmul.bf16.gmra.mxu0 %v379
      %v411 = vpop.f32.mrf.mxu0
      %v412 = vadd.f32 0.0, %v411
      %v413 = vpop.f32.mrf.mxu0
      %v414 = vadd.f32 0.0, %v413
      %415 = vmatmul.bf16.gmra.mxu0 %v382
      %v416 = vpop.f32.mrf.mxu0
      %v417 = vadd.f32 0.0, %v416
      %v418 = vpop.f32.mrf.mxu0
      %419 = vdwg.mxu0
      %v421 = vunpack.c.l.b16 %v284
      %v422 = vunpack.c.h.b16 %v284
      %v423 = vpack.c.b16 %v421, %v421
      %v424 = vpack.c.b16 %v422, %v422
      %v425 = vsel %vm313, %v285, 0
      %v428 = vsel %vm313, %v286, 0
      %v431 = vsel %vm320, %v423, 0
      %v434 = vsel %vm320, %v424, 0
      %436 = vmatpush.bf16.msra.mxu0 0
      %437 = vmatpush.bf16.msra.mxu0 0
      %438 = vmatpush.bf16.msra.mxu0 0
      %439 = vmatpush.bf16.msra.mxu0 0
      %440 = vmatpush.bf16.msra.mxu0 0
      %441 = vmatpush.bf16.msra.mxu0 0
      %442 = vmatpush.bf16.msra.mxu0 0
      %443 = vmatpush.bf16.msra.mxu0 %v431
      %444 = vmatmul.bf16.gmra.mxu0 %v425
      %v445 = vpop.f32.mrf.mxu0
      %v446 = vadd.f32 %v337, %v445
      %v447 = vpop.f32.mrf.mxu0
      %v448 = vadd.f32 %v339, %v447
      %449 = vmatmul.bf16.gmra.mxu0 %v428
      %v450 = vpop.f32.mrf.mxu0
      %v451 = vadd.f32 %v342, %v450
      %v452 = vpop.f32.mrf.mxu0
      %453 = vdwg.mxu0
      %454 = vmatpush.bf16.msra.mxu0 0
      %455 = vmatpush.bf16.msra.mxu0 0
      %456 = vmatpush.bf16.msra.mxu0 0
      %457 = vmatpush.bf16.msra.mxu0 0
      %458 = vmatpush.bf16.msra.mxu0 0
      %459 = vmatpush.bf16.msra.mxu0 0
      %460 = vmatpush.bf16.msra.mxu0 0
      %461 = vmatpush.bf16.msra.mxu0 %v434
      %462 = vmatmul.bf16.gmra.mxu0 %v425
      %v463 = vpop.f32.mrf.mxu0
      %v464 = vadd.f32 %v355, %v463
      %v465 = vpop.f32.mrf.mxu0
      %v466 = vadd.f32 %v357, %v465
      %467 = vmatmul.bf16.gmra.mxu0 %v428
      %v468 = vpop.f32.mrf.mxu0
      %v469 = vadd.f32 %v360, %v468
      %v470 = vpop.f32.mrf.mxu0
      %471 = vdwg.mxu0
      %v472 = vsel %vm313, %v287, 0
      %v475 = vsel %vm313, %v288, 0
      %477 = vmatpush.bf16.msra.mxu0 0
      %478 = vmatpush.bf16.msra.mxu0 0
      %479 = vmatpush.bf16.msra.mxu0 0
      %480 = vmatpush.bf16.msra.mxu0 0
      %481 = vmatpush.bf16.msra.mxu0 0
      %482 = vmatpush.bf16.msra.mxu0 0
      %483 = vmatpush.bf16.msra.mxu0 0
      %484 = vmatpush.bf16.msra.mxu0 %v431
      %485 = vmatmul.bf16.gmra.mxu0 %v472
      %v486 = vpop.f32.mrf.mxu0
      %v487 = vadd.f32 %v394, %v486
      %v488 = vpop.f32.mrf.mxu0
      %v489 = vadd.f32 %v396, %v488
      %490 = vmatmul.bf16.gmra.mxu0 %v475
      %v491 = vpop.f32.mrf.mxu0
      %v492 = vadd.f32 %v399, %v491
      %v493 = vpop.f32.mrf.mxu0
      %494 = vdwg.mxu0
      %495 = vmatpush.bf16.msra.mxu0 0
      %496 = vmatpush.bf16.msra.mxu0 0
      %497 = vmatpush.bf16.msra.mxu0 0
      %498 = vmatpush.bf16.msra.mxu0 0
      %499 = vmatpush.bf16.msra.mxu0 0
      %500 = vmatpush.bf16.msra.mxu0 0
      %501 = vmatpush.bf16.msra.mxu0 0
      %502 = vmatpush.bf16.msra.mxu0 %v434
      %503 = vmatmul.bf16.gmra.mxu0 %v472
      %v504 = vpop.f32.mrf.mxu0
      %v505 = vadd.f32 %v412, %v504
      %v506 = vpop.f32.mrf.mxu0
      %v507 = vadd.f32 %v414, %v506
      %508 = vmatmul.bf16.gmra.mxu0 %v475
      %v509 = vpop.f32.mrf.mxu0
      %v510 = vadd.f32 %v417, %v509
      %v511 = vpop.f32.mrf.mxu0
      %512 = vdwg.mxu0
      %v513 = vld [vmem:[%s3 + $0x10] sm:$0xff]
      %vm516 = vcmask 1046528
      %v517 = vrot.slane %v285, 1
      %v518 = vrot.slane %v290, 1
      %v519 = vsel %vm516, %v517, %v518
      %v521 = vunpack.c.l.b16 %v513
      %v522 = vunpack.c.h.b16 %v513
      %v523 = vpack.c.b16 %v521, %v521
      %v524 = vpack.c.b16 %v522, %v522
      %v526 = vsel %vm313, %v519, 0
      %v529 = vsel %vm313, %v518, 0
      %v532 = vsel %vm320, %v523, 0
      %v535 = vsel %vm320, %v524, 0
      %537 = vmatpush.bf16.msra.mxu0 0
      %538 = vmatpush.bf16.msra.mxu0 0
      %539 = vmatpush.bf16.msra.mxu0 0
      %540 = vmatpush.bf16.msra.mxu0 0
      %541 = vmatpush.bf16.msra.mxu0 0
      %542 = vmatpush.bf16.msra.mxu0 0
      %543 = vmatpush.bf16.msra.mxu0 0
      %544 = vmatpush.bf16.msra.mxu0 %v532
      %545 = vmatmul.bf16.gmra.mxu0 %v526
      %v546 = vpop.f32.mrf.mxu0
      %v547 = vadd.f32 0.0, %v546
      %v548 = vpop.f32.mrf.mxu0
      %v549 = vadd.f32 0.0, %v548
      %550 = vmatmul.bf16.gmra.mxu0 %v529
      %v551 = vpop.f32.mrf.mxu0
      %v552 = vadd.f32 0.0, %v551
      %v553 = vpop.f32.mrf.mxu0
      %554 = vdwg.mxu0
      %555 = vmatpush.bf16.msra.mxu0 0
      %556 = vmatpush.bf16.msra.mxu0 0
      %557 = vmatpush.bf16.msra.mxu0 0
      %558 = vmatpush.bf16.msra.mxu0 0
      %559 = vmatpush.bf16.msra.mxu0 0
      %560 = vmatpush.bf16.msra.mxu0 0
      %561 = vmatpush.bf16.msra.mxu0 0
      %562 = vmatpush.bf16.msra.mxu0 %v535
      %563 = vmatmul.bf16.gmra.mxu0 %v526
      %v564 = vpop.f32.mrf.mxu0
      %v565 = vadd.f32 0.0, %v564
      %v566 = vpop.f32.mrf.mxu0
      %v567 = vadd.f32 0.0, %v566
      %568 = vmatmul.bf16.gmra.mxu0 %v529
      %v569 = vpop.f32.mrf.mxu0
      %v570 = vadd.f32 0.0, %v569
      %v571 = vpop.f32.mrf.mxu0
      %572 = vdwg.mxu0
      %v575 = vrot.slane %v287, 1
      %v576 = vrot.slane %v291, 1
      %v577 = vsel %vm516, %v575, %v576
      %v579 = vsel %vm313, %v577, 0
      %v582 = vsel %vm313, %v576, 0
      %584 = vmatpush.bf16.msra.mxu0 0
      %585 = vmatpush.bf16.msra.mxu0 0
      %586 = vmatpush.bf16.msra.mxu0 0
      %587 = vmatpush.bf16.msra.mxu0 0
      %588 = vmatpush.bf16.msra.mxu0 0
      %589 = vmatpush.bf16.msra.mxu0 0
      %590 = vmatpush.bf16.msra.mxu0 0
      %591 = vmatpush.bf16.msra.mxu0 %v532
      %592 = vmatmul.bf16.gmra.mxu0 %v579
      %v593 = vpop.f32.mrf.mxu0
      %v594 = vadd.f32 0.0, %v593
      %v595 = vpop.f32.mrf.mxu0
      %v596 = vadd.f32 0.0, %v595
      %597 = vmatmul.bf16.gmra.mxu0 %v582
      %v598 = vpop.f32.mrf.mxu0
      %v599 = vadd.f32 0.0, %v598
      %v600 = vpop.f32.mrf.mxu0
      %601 = vdwg.mxu0
      %602 = vmatpush.bf16.msra.mxu0 0
      %603 = vmatpush.bf16.msra.mxu0 0
      %604 = vmatpush.bf16.msra.mxu0 0
      %605 = vmatpush.bf16.msra.mxu0 0
      %606 = vmatpush.bf16.msra.mxu0 0
      %607 = vmatpush.bf16.msra.mxu0 0
      %608 = vmatpush.bf16.msra.mxu0 0
      %609 = vmatpush.bf16.msra.mxu0 %v535
      %610 = vmatmul.bf16.gmra.mxu0 %v579
      %v611 = vpop.f32.mrf.mxu0
      %v612 = vadd.f32 0.0, %v611
      %v613 = vpop.f32.mrf.mxu0
      %v614 = vadd.f32 0.0, %v613
      %615 = vmatmul.bf16.gmra.mxu0 %v582
      %v616 = vpop.f32.mrf.mxu0
      %v617 = vadd.f32 0.0, %v616
      %v618 = vpop.f32.mrf.mxu0
      %619 = vdwg.mxu0
      %v620 = vadd.f32 %v446, %v547
      %v621 = vadd.f32 %v464, %v565
      %v622 = vadd.f32 %v448, %v549
      %v623 = vadd.f32 %v466, %v567
      %v624 = vadd.f32 %v451, %v552
      %v625 = vadd.f32 %v469, %v570
      %v626 = vadd.f32 %v487, %v594
      %v627 = vadd.f32 %v505, %v612
      %v628 = vadd.f32 %v489, %v596
      %v629 = vadd.f32 %v507, %v614
      %v630 = vadd.f32 %v492, %v599
      %v631 = vadd.f32 %v510, %v617
      %v632 = vld [vmem:[%s3 + $0x18] sm:$0xff]
      %vm633 = vsmask.f32 6400
      %v634 = vrot.slane %v294, 1
      %v635 = vrot.slane %v296, 2
      %v636 = vor.u32 %v634, %v635
      %v637 = vrot.slane %v305, 1
      %v638 = vrot.slane %v301, 2
      %v639 = vor.u32 %v637, %v638
      %v640 = vsel %vm633, %v636, %v639
      %v642 = vunpack.c.l.b16 %v632
      %v643 = vunpack.c.h.b16 %v632
      %v644 = vpack.c.b16 %v642, %v642
      %v645 = vpack.c.b16 %v643, %v643
      %v647 = vsel %vm313, %v640, 0
      %v650 = vsel %vm313, %v639, 0
      %v653 = vsel %vm320, %v644, 0
      %v656 = vsel %vm320, %v645, 0
      %658 = vmatpush.bf16.msra.mxu0 0
      %659 = vmatpush.bf16.msra.mxu0 0
      %660 = vmatpush.bf16.msra.mxu0 0
      %661 = vmatpush.bf16.msra.mxu0 0
      %662 = vmatpush.bf16.msra.mxu0 0
      %663 = vmatpush.bf16.msra.mxu0 0
      %664 = vmatpush.bf16.msra.mxu0 0
      %665 = vmatpush.bf16.msra.mxu0 %v653
      %666 = vmatmul.bf16.gmra.mxu0 %v647
      %v667 = vpop.f32.mrf.mxu0
      %v668 = vadd.f32 0.0, %v667
      %v669 = vpop.f32.mrf.mxu0
      %v670 = vadd.f32 0.0, %v669
      %671 = vmatmul.bf16.gmra.mxu0 %v650
      %v672 = vpop.f32.mrf.mxu0
      %v673 = vadd.f32 0.0, %v672
      %v674 = vpop.f32.mrf.mxu0
      %675 = vdwg.mxu0
      %676 = vmatpush.bf16.msra.mxu0 0
      %677 = vmatpush.bf16.msra.mxu0 0
      %678 = vmatpush.bf16.msra.mxu0 0
      %679 = vmatpush.bf16.msra.mxu0 0
      %680 = vmatpush.bf16.msra.mxu0 0
      %681 = vmatpush.bf16.msra.mxu0 0
      %682 = vmatpush.bf16.msra.mxu0 0
      %683 = vmatpush.bf16.msra.mxu0 %v656
      %684 = vmatmul.bf16.gmra.mxu0 %v647
      %v685 = vpop.f32.mrf.mxu0
      %v686 = vadd.f32 0.0, %v685
      %v687 = vpop.f32.mrf.mxu0
      %v688 = vadd.f32 0.0, %v687
      %689 = vmatmul.bf16.gmra.mxu0 %v650
      %v690 = vpop.f32.mrf.mxu0
      %v691 = vadd.f32 0.0, %v690
      %v692 = vpop.f32.mrf.mxu0
      %693 = vdwg.mxu0
      %v694 = vrot.slane %v364, 1
      %v695 = vrot.slane %v366, 2
      %v696 = vor.u32 %v694, %v695
      %v697 = vrot.slane %v375, 1
      %v698 = vrot.slane %v371, 2
      %v699 = vor.u32 %v697, %v698
      %v700 = vsel %vm633, %v696, %v699
      %v702 = vsel %vm313, %v700, 0
      %v705 = vsel %vm313, %v699, 0
      %707 = vmatpush.bf16.msra.mxu0 0
      %708 = vmatpush.bf16.msra.mxu0 0
      %709 = vmatpush.bf16.msra.mxu0 0
      %710 = vmatpush.bf16.msra.mxu0 0
      %711 = vmatpush.bf16.msra.mxu0 0
      %712 = vmatpush.bf16.msra.mxu0 0
      %713 = vmatpush.bf16.msra.mxu0 0
      %714 = vmatpush.bf16.msra.mxu0 %v653
      %715 = vmatmul.bf16.gmra.mxu0 %v702
      %v716 = vpop.f32.mrf.mxu0
      %v717 = vadd.f32 0.0, %v716
      %v718 = vpop.f32.mrf.mxu0
      %v719 = vadd.f32 0.0, %v718
      %720 = vmatmul.bf16.gmra.mxu0 %v705
      %v721 = vpop.f32.mrf.mxu0
      %v722 = vadd.f32 0.0, %v721
      %v723 = vpop.f32.mrf.mxu0
      %724 = vdwg.mxu0
      %725 = vmatpush.bf16.msra.mxu0 0
      %726 = vmatpush.bf16.msra.mxu0 0
      %727 = vmatpush.bf16.msra.mxu0 0
      %728 = vmatpush.bf16.msra.mxu0 0
      %729 = vmatpush.bf16.msra.mxu0 0
      %730 = vmatpush.bf16.msra.mxu0 0
      %731 = vmatpush.bf16.msra.mxu0 0
      %732 = vmatpush.bf16.msra.mxu0 %v656
      %733 = vmatmul.bf16.gmra.mxu0 %v702
      %v734 = vpop.f32.mrf.mxu0
      %v735 = vadd.f32 0.0, %v734
      %v736 = vpop.f32.mrf.mxu0
      %v737 = vadd.f32 0.0, %v736
      %738 = vmatmul.bf16.gmra.mxu0 %v705
      %v739 = vpop.f32.mrf.mxu0
      %v740 = vadd.f32 0.0, %v739
      %v741 = vpop.f32.mrf.mxu0
      %742 = vdwg.mxu0
      %v743 = vadd.f32 %v620, %v668
      %v744 = vadd.f32 %v621, %v686
      %v745 = vadd.f32 %v622, %v670
      %v746 = vadd.f32 %v623, %v688
      %v747 = vadd.f32 %v624, %v673
      %v748 = vadd.f32 %v625, %v691
      %v749 = vadd.f32 %v626, %v717
      %v750 = vadd.f32 %v627, %v735
      %v751 = vadd.f32 %v628, %v719
      %v752 = vadd.f32 %v629, %v737
      %v753 = vadd.f32 %v630, %v722
      %v754 = vadd.f32 %v631, %v740
      %v755 = vmul.f32 %v743, %v743
      %v756 = vmul.f32 %v745, %v745
      %v757 = vmul.f32 %v747, %v747
      %v758 = vmul.f32 %v744, %v744
      %v759 = vmul.f32 %v746, %v746
      %v760 = vmul.f32 %v748, %v748
      %764 = vrot.lane.b32.xlu0 %v758, 1
      %v765 = vpop.permute.xlu0 %764
      %766 = vrot.lane.b32.xlu0 %v759, 1
      %v767 = vpop.permute.xlu0 %766
      %768 = vrot.lane.b32.xlu0 %v760, 1
      %v769 = vpop.permute.xlu0 %768
      %v773 = vadd.f32 %v755, %v765
      %v774 = vadd.f32 %v756, %v767
      %v775 = vadd.f32 %v757, %v769
      %v776 = vrsqrt.pop %v773
      %v777 = vmul.f32 %v776, %v773
      %v778 = vmul.f32 %v777, %v776
      %v779 = vmul.f32 0.5, %v778
      %v780 = vsub.f32 1.5, %v779
      %v781 = vmul.f32 %v776, %v780
      %v782 = vmul.f32 %v773, %v781
      %vm783 = vcmp.eq.f32.partialorder %v773, inf
      %v784 = vsel %vm783, %v773, %v782
      %vm785 = vcmp.eq.f32.partialorder %v773, 0.0
      %v786 = vand.u32 %v773, 2147483648
      %v787 = vsel %vm785, %v786, %v784
      %v788 = vrsqrt.pop %v774
      %v789 = vmul.f32 %v788, %v774
      %v790 = vmul.f32 %v789, %v788
      %v791 = vmul.f32 0.5, %v790
      %v792 = vsub.f32 1.5, %v791
      %v793 = vmul.f32 %v788, %v792
      %v794 = vmul.f32 %v774, %v793
      %vm795 = vcmp.eq.f32.partialorder %v774, inf
      %v796 = vsel %vm795, %v774, %v794
      %vm797 = vcmp.eq.f32.partialorder %v774, 0.0
      %v798 = vand.u32 %v774, 2147483648
      %v799 = vsel %vm797, %v798, %v796
      %v800 = vrsqrt.pop %v775
      %v801 = vmul.f32 %v800, %v775
      %v802 = vmul.f32 %v801, %v800
      %v803 = vmul.f32 0.5, %v802
      %v804 = vsub.f32 1.5, %v803
      %v805 = vmul.f32 %v800, %v804
      %v806 = vmul.f32 %v775, %v805
      %vm807 = vcmp.eq.f32.partialorder %v775, inf
      %v808 = vsel %vm807, %v775, %v806
      %vm809 = vcmp.eq.f32.partialorder %v775, 0.0
      %v810 = vand.u32 %v775, 2147483648
      %v811 = vsel %vm809, %v810, %v808
      %v812 = vand.u32 2147483647, %v743
      %v813 = vand.u32 2147483647, %v745
      %v814 = vand.u32 2147483647, %v747
      %v815 = vmul.f32 %v749, %v749
      %v816 = vmul.f32 %v751, %v751
      %v817 = vmul.f32 %v753, %v753
      %v818 = vmul.f32 %v750, %v750
      %v819 = vmul.f32 %v752, %v752
      %v820 = vmul.f32 %v754, %v754
      %824 = vrot.lane.b32.xlu0 %v818, 1
      %v825 = vpop.permute.xlu0 %824
      %826 = vrot.lane.b32.xlu0 %v819, 1
      %v827 = vpop.permute.xlu0 %826
      %828 = vrot.lane.b32.xlu0 %v820, 1
      %v829 = vpop.permute.xlu0 %828
      %v833 = vadd.f32 %v815, %v825
      %v834 = vadd.f32 %v816, %v827
      %v835 = vadd.f32 %v817, %v829
      %v836 = vrsqrt.pop %v833
      %v837 = vmul.f32 %v836, %v833
      %v838 = vmul.f32 %v837, %v836
      %v839 = vmul.f32 0.5, %v838
      %v840 = vsub.f32 1.5, %v839
      %v841 = vmul.f32 %v836, %v840
      %v842 = vmul.f32 %v833, %v841
      %vm843 = vcmp.eq.f32.partialorder %v833, inf
      %v844 = vsel %vm843, %v833, %v842
      %vm845 = vcmp.eq.f32.partialorder %v833, 0.0
      %v846 = vand.u32 %v833, 2147483648
      %v847 = vsel %vm845, %v846, %v844
      %v848 = vrsqrt.pop %v834
      %v849 = vmul.f32 %v848, %v834
      %v850 = vmul.f32 %v849, %v848
      %v851 = vmul.f32 0.5, %v850
      %v852 = vsub.f32 1.5, %v851
      %v853 = vmul.f32 %v848, %v852
      %v854 = vmul.f32 %v834, %v853
      %vm855 = vcmp.eq.f32.partialorder %v834, inf
      %v856 = vsel %vm855, %v834, %v854
      %vm857 = vcmp.eq.f32.partialorder %v834, 0.0
      %v858 = vand.u32 %v834, 2147483648
      %v859 = vsel %vm857, %v858, %v856
      %v860 = vrsqrt.pop %v835
      %v861 = vmul.f32 %v860, %v835
      %v862 = vmul.f32 %v861, %v860
      %v863 = vmul.f32 0.5, %v862
      %v864 = vsub.f32 1.5, %v863
      %v865 = vmul.f32 %v860, %v864
      %v866 = vmul.f32 %v835, %v865
      %vm867 = vcmp.eq.f32.partialorder %v835, inf
      %v868 = vsel %vm867, %v835, %v866
      %vm869 = vcmp.eq.f32.partialorder %v835, 0.0
      %v870 = vand.u32 %v835, 2147483648
      %v871 = vsel %vm869, %v870, %v868
      %v872 = vand.u32 2147483647, %v749
      %v873 = vand.u32 2147483647, %v751
      %v874 = vand.u32 2147483647, %v753
      %v875 = vsub.f32 %v787, %v847
      %v876 = vsub.f32 %v799, %v859
      %v877 = vsub.f32 %v811, %v871
      %v878 = vsub.f32 %v812, %v872
      %v879 = vsub.f32 %v813, %v873
      %v880 = vsub.f32 %v814, %v874
      %v881 = vmul.f32 %v875, %v875
      %v882 = vmul.f32 %v876, %v876
      %v883 = vmul.f32 %v877, %v877
      %887 = vrot.lane.b32.xlu0 %v881, 127
      %v888 = vpop.permute.xlu0 %887
      %889 = vrot.lane.b32.xlu0 %v882, 127
      %v890 = vpop.permute.xlu0 %889
      %891 = vrot.lane.b32.xlu0 %v883, 127
      %v892 = vpop.permute.xlu0 %891
      %vm896 = vcmask 1039360
      %v897 = vsel %vm896, %v888, 0.0
      %898 = vadd.xlane.f32.xlu0 %v897
      %v899 = vpop.xlane.xlu0 %898
      %v900 = vsel %vm896, %v890, 0.0
      %901 = vadd.xlane.f32.xlu0 %v900
      %v902 = vpop.xlane.xlu0 %901
      %v903 = vsel %vm896, %v892, 0.0
      %904 = vadd.xlane.f32.xlu0 %v903
      %v905 = vpop.xlane.xlu0 %904
      %v906 = vmul.f32 %v878, %v878
      %v907 = vmul.f32 %v879, %v879
      %v908 = vmul.f32 %v880, %v880
      %v909 = vadd.f32 %v899, %v906
      %v910 = vadd.f32 %v902, %v907
      %v911 = vadd.f32 %v905, %v908
      %v912 = vld [vmem:[%s263] sm:$0xff]
      %v913 = vld [vmem:[%s263 + $0x8] sm:$0xff]
      %v914 = vld [vmem:[%s263 + $0x10] sm:$0xff]
      %v915 = vmul.f32 %v909, %v912
      %v916 = vmul.f32 %v910, %v913
      %v917 = vmul.f32 %v911, %v914
      %vm918 = vcmask 7168
      %v919 = vsel %vm918, %v915, 0.0
      %v920 = vsel %vm918, %v916, 0.0
      %v921 = vadd.f32 %v919, %v920
      %v922 = vsel %vm918, %v917, 0.0
      %v923 = vadd.f32 %v921, %v922
      %924 = vadd.xlane.f32.xlu0 %v923
      %v925 = vpop.xlane.xlu0 %924
      %v926 = vrot.slane %v925, 4
      %v927 = vadd.f32 %v925, %v926
      %v928 = vrot.slane %v927, 2
      %v929 = vadd.f32 %v927, %v928
      %v930 = vrot.slane %v929, 1
      %v931 = vadd.f32 %v929, %v930
      %s932 = vtos %v931
      %v933 = vstv %s932
      %934 = vst [vmem:[%s271] sm:$0xff] %v933
      %p935 = scmp.lt.s32.totalorder %s19, 1
      %s936 = scalar_select %p935, %s19, 1
      %p937 = scmp.lt.s32.totalorder %s20, 0
      %s938 = scalar_select %p937, %s20, 0
      %s939 = sadd.s32 %s938, %s936
      %s940 = smul.addr %s939, 8
      %s941 = scalar_lea.vmem %s4, %s940
      // Predicated region
      $region37: #{a_call__.2} parent=35 // pred_check
        %p942 = pneg %p148
      $region38: #{a_call__.2} parent=35 // pred_check_branch
        %944 = sbr.rel (%p942) target = $region40
      $region39: #{a_call__.2} parent=35 // pred_region
        _
      $region40: #{a_call__.2} parent=35 // pred_fallthru
        _
    $region36: #{a_call__.2} parent=5 // pred_fallthru
      _
    %p945 = scmp.le.s32.totalorder 2, %s10
    // Predicated region
    $region41: #{a_call__.2} parent=5 // pred_check
      %p946 = pneg %p945
    $region42: #{a_call__.2} parent=5 // pred_check_branch
      %948 = sbr.rel (%p946) target = $region44
    $region43: #{a_call__.2} parent=5 // pred_region
      %s949 = ssub.s32 %s10, 2
      // Predicated region
      $region45: #{a_call__.2} parent=43 // pred_check
        %p950 = pneg %p154
      $region46: #{a_call__.2} parent=43 // pred_check_branch
        %952 = sbr.rel (%p950) target = $region48
      $region47: #{a_call__.2} parent=43 // pred_region
        %p953 = scmp.lt.s32.totalorder %s21, 1
        %s954 = scalar_select %p953, %s21, 1
        %p955 = scmp.lt.s32.totalorder %s22, 0
        %s956 = scalar_select %p955, %s22, 0
        %s957 = sadd.s32 %s956, %s954
        %s958 = smul.addr %s957, 8
        %s959 = scalar_lea.vmem %s4, %s958
      $region48: #{a_call__.2} parent=43 // pred_fallthru
        _
    $region44: #{a_call__.2} parent=5 // pred_fallthru
      _
  $region6: #{a_call__.2} parent=0 // loop_footer
    %s14 = sadd.s32 1, %s10
  $region7: #{a_call__.2} parent=0 // loop_footer_branch
    %9 = sbr.rel target = $region3
  $region8: #{a_call__.2} parent=0 // loop_exit
    _

// kernel: a_call__.3
$region0: #{a_call__.3}
  #allocation0 [shape = 'u32[]', space=smem, size = 0x4, offset = 0x4, fixed_abs, tag = 'smem constant byte address 0x4 - core index']
  #allocation1 [shape = 'u32[72,128]{1,0:T(1,128)}', space=vmem, size = 0x9000, scoped, tag = 'internal scratch']
  %s0 = inlined_call_operand.vmem [shape: f32[2,24,16], index: 0, kind: input, shape index: {}]
  %s1 = inlined_call_operand.vmem [shape: f32[2,24,16], index: 1, kind: input, shape index: {}]
  %s2 = inlined_call_operand.vmem [shape: f32[2,16,1], index: 2, kind: input, shape index: {}]
  %s3 = inlined_call_operand.vmem [shape: bf16[64,256], index: 3, kind: input, shape index: {}]
  %s4 = inlined_call_operand.vmem [shape: f32[2,1,8,128], index: 4, kind: output, shape index: {}]
  %s5 = sld [smem:[#allocation0]]
  $region49: #{a_call__.3} parent=0
    _
  %s7 = ssub.s32 1, %s5
  %s8 = scalar_select 0, %s7, %s5
  loop: start=0, step=1, limit=4
  $region2: #{a_call__.3} parent=0 // loop_pre_header
    _
  $region3: #{a_call__.3} parent=0 // loop_header
    %s10 = sphi 0, %s14
    %p11 = scmp.ge.s32.totalorder %s10, 4
    %s17 = sphi 0, %s29
    %s18 = sphi 0, %s25
    %s19 = sphi 0, %s17
    %s20 = sphi 0, %s18
    %s21 = sphi 0, %s19
    %s22 = sphi 0, %s20
    %s32 = sphi 0, %s34
    %s35 = sphi 0, %s32
    %s36 = sphi 0, %s35
    %s52 = sphi 0, %s36
    %s58 = sphi 0, %s60
    %s61 = sphi 0, %s58
    %s62 = sphi 0, %s61
    %s78 = sphi 0, %s62
    %s86 = sphi 0, %s88
    %s89 = sphi 0, %s86
    %s90 = sphi 0, %s89
    %s106 = sphi 0, %s90
    %s110 = sphi 0, %s110
    %s112 = sphi 0, %s110
    %s113 = sphi 0, %s112
    %s127 = sphi 0, %s113
    %s135 = sphi 0, %s137
    %s138 = sphi 0, %s135
    %s139 = sphi 0, %s138
    %s155 = sphi 0, %s139
  $region4: #{a_call__.3} parent=0 // loop_header_branch
    %13 = sbr.rel (%p11) target = $region8
  $region5: #{a_call__.3} parent=0 // loop_body
    %s15 = ssub.s32 %s10, 1
    %s16 = ssub.s32 %s10, 2
    %s23 = sadd.s32 1, %s18
    %p24 = scmp.ge.s32.totalorder %s23, 1
    %s25 = scalar_select %p24, 0, %s23
    %s26 = sadd.s32 1, %s17
    %s27 = scalar_select %p24, %s26, %s17
    %p28 = scmp.ge.s32.totalorder %s27, 2
    %s29 = scalar_select %p28, 0, %s27
    %s30 = ssub.s32 %s17, %s29
    %p31 = scmp.eq.s32.totalorder %s30, 0
    %s33 = sadd.s32 %s32, 1
    %s34 = scalar_select %p31, %s32, %s33
    %p37 = pneg %p31
    %p38 = scmp.eq.s32.totalorder %s10, 1
    %p39 = por %p37, %p38
    %p40 = scmp.ne.s32.totalorder %s32, %s35
    %p41 = scmp.eq.s32.totalorder %s10, 0
    %p42 = por %p40, %p41
    %p43 = scmp.ne.s32.totalorder %s32, %s35
    %p44 = scmp.eq.s32.totalorder %s15, 1
    %p45 = por %p43, %p44
    %p46 = scmp.ne.s32.totalorder %s35, %s36
    %p47 = scmp.eq.s32.totalorder %s15, 0
    %p48 = por %p46, %p47
    %p49 = scmp.ne.s32.totalorder %s35, %s36
    %p50 = scmp.eq.s32.totalorder %s16, 1
    %p51 = por %p49, %p50
    %p53 = scmp.ne.s32.totalorder %s36, %s52
    %p54 = scmp.eq.s32.totalorder %s16, 0
    %p55 = por %p53, %p54
    %s56 = ssub.s32 %s17, %s29
    %p57 = scmp.eq.s32.totalorder %s56, 0
    %s59 = sadd.s32 %s58, 1
    %s60 = scalar_select %p57, %s58, %s59
    %p63 = pneg %p57
    %p64 = scmp.eq.s32.totalorder %s10, 1
    %p65 = por %p63, %p64
    %p66 = scmp.ne.s32.totalorder %s58, %s61
    %p67 = scmp.eq.s32.totalorder %s10, 0
    %p68 = por %p66, %p67
    %p69 = scmp.ne.s32.totalorder %s58, %s61
    %p70 = scmp.eq.s32.totalorder %s15, 1
    %p71 = por %p69, %p70
    %p72 = scmp.ne.s32.totalorder %s61, %s62
    %p73 = scmp.eq.s32.totalorder %s15, 0
    %p74 = por %p72, %p73
    %p75 = scmp.ne.s32.totalorder %s61, %s62
    %p76 = scmp.eq.s32.totalorder %s16, 1
    %p77 = por %p75, %p76
    %p79 = scmp.ne.s32.totalorder %s62, %s78
    %p80 = scmp.eq.s32.totalorder %s16, 0
    %p81 = por %p79, %p80
    %s82 = ssub.s32 %s17, %s29
    %s83 = ssub.s32 %s18, %s25
    %s84 = sor.u32 %s82, %s83
    %p85 = scmp.eq.s32.totalorder %s84, 0
    %s87 = sadd.s32 %s86, 1
    %s88 = scalar_select %p85, %s86, %s87
    %p91 = pneg %p85
    %p92 = scmp.eq.s32.totalorder %s10, 1
    %p93 = por %p91, %p92
    %p94 = scmp.ne.s32.totalorder %s86, %s89
    %p95 = scmp.eq.s32.totalorder %s10, 0
    %p96 = por %p94, %p95
    %p97 = scmp.ne.s32.totalorder %s86, %s89
    %p98 = scmp.eq.s32.totalorder %s15, 1
    %p99 = por %p97, %p98
    %p100 = scmp.ne.s32.totalorder %s89, %s90
    %p101 = scmp.eq.s32.totalorder %s15, 0
    %p102 = por %p100, %p101
    %p103 = scmp.ne.s32.totalorder %s89, %s90
    %p104 = scmp.eq.s32.totalorder %s16, 1
    %p105 = por %p103, %p104
    %p107 = scmp.ne.s32.totalorder %s90, %s106
    %p108 = scmp.eq.s32.totalorder %s16, 0
    %p109 = por %p107, %p108
    %s111 = sadd.s32 %s110, 1
    %p114 = scmp.eq.s32.totalorder %s10, 1
    %p115 = scmp.ne.s32.totalorder %s110, %s112
    %p116 = scmp.eq.s32.totalorder %s10, 0
    %p117 = por %p115, %p116
    %p118 = scmp.ne.s32.totalorder %s110, %s112
    %p119 = scmp.eq.s32.totalorder %s15, 1
    %p120 = por %p118, %p119
    %p121 = scmp.ne.s32.totalorder %s112, %s113
    %p122 = scmp.eq.s32.totalorder %s15, 0
    %p123 = por %p121, %p122
    %p124 = scmp.ne.s32.totalorder %s112, %s113
    %p125 = scmp.eq.s32.totalorder %s16, 1
    %p126 = por %p124, %p125
    %p128 = scmp.ne.s32.totalorder %s113, %s127
    %p129 = scmp.eq.s32.totalorder %s16, 0
    %p130 = por %p128, %p129
    %s131 = ssub.s32 %s17, %s29
    %s132 = ssub.s32 %s18, %s25
    %s133 = sor.u32 %s131, %s132
    %p134 = scmp.eq.s32.totalorder %s133, 0
    %s136 = sadd.s32 %s135, 1
    %s137 = scalar_select %p134, %s135, %s136
    %p140 = pneg %p134
    %p141 = scmp.eq.s32.totalorder %s10, 1
    %p142 = por %p140, %p141
    %p143 = scmp.ne.s32.totalorder %s135, %s138
    %p144 = scmp.eq.s32.totalorder %s10, 0
    %p145 = por %p143, %p144
    %p146 = scmp.ne.s32.totalorder %s135, %s138
    %p147 = scmp.eq.s32.totalorder %s15, 1
    %p148 = por %p146, %p147
    %p149 = scmp.ne.s32.totalorder %s138, %s139
    %p150 = scmp.eq.s32.totalorder %s15, 0
    %p151 = por %p149, %p150
    %p152 = scmp.ne.s32.totalorder %s138, %s139
    %p153 = scmp.eq.s32.totalorder %s16, 1
    %p154 = por %p152, %p153
    %p156 = scmp.ne.s32.totalorder %s139, %s155
    %p157 = scmp.eq.s32.totalorder %s16, 0
    %p158 = por %p156, %p157
    %p159 = scmp.le.s32.totalorder 1, %s10
    %p160 = scmp.lt.s32.totalorder %s10, 3
    %p161 = pnand %p159, %p160
    %p162 = pneg %p161
    // Predicated region
    $region9: #{a_call__.3} parent=5 // pred_check
      _
    $region10: #{a_call__.3} parent=5 // pred_check_branch
      %164 = sbr.rel (%p161) target = $region12
    $region11: #{a_call__.3} parent=5 // pred_region
      %s165 = ssub.s32 %s10, 1
      // Predicated region
      $region13: #{a_call__.3} parent=11 // pred_check
        %p166 = pneg %p123
      $region14: #{a_call__.3} parent=11 // pred_check_branch
        %168 = sbr.rel (%p166) target = $region16
      $region15: #{a_call__.3} parent=11 // pred_region
        _
      $region16: #{a_call__.3} parent=11 // pred_fallthru
        _
    $region12: #{a_call__.3} parent=5 // pred_fallthru
      _
    %p169 = scmp.lt.s32.totalorder %s10, 2
    // Predicated region
    $region17: #{a_call__.3} parent=5 // pred_check
      %p170 = pneg %p169
    $region18: #{a_call__.3} parent=5 // pred_check_branch
      %172 = sbr.rel (%p170) target = $region20
    $region19: #{a_call__.3} parent=5 // pred_region
      // Predicated region
      $region21: #{a_call__.3} parent=19 // pred_check
        %p173 = pneg %p42
      $region22: #{a_call__.3} parent=19 // pred_check_branch
        %175 = sbr.rel (%p173) target = $region24
      $region23: #{a_call__.3} parent=19 // pred_region
        %p176 = scmp.lt.s32.totalorder %s17, 1
        %s177 = scalar_select %p176, %s17, 1
        %s178 = smul.addr %s177, 3
        %s179 = smul.addr %s178, 8
        %s180 = scalar_lea.vmem %s0, %s179
      $region24: #{a_call__.3} parent=19 // pred_fallthru
        _
      // Predicated region
      $region25: #{a_call__.3} parent=19 // pred_check
        %p181 = pneg %p68
      $region26: #{a_call__.3} parent=19 // pred_check_branch
        %183 = sbr.rel (%p181) target = $region28
      $region27: #{a_call__.3} parent=19 // pred_region
        %p184 = scmp.lt.s32.totalorder %s17, 1
        %s185 = scalar_select %p184, %s17, 1
        %s186 = smul.addr %s185, 3
        %s187 = smul.addr %s186, 8
        %s188 = scalar_lea.vmem %s1, %s187
      $region28: #{a_call__.3} parent=19 // pred_fallthru
        _
      // Predicated region
      $region29: #{a_call__.3} parent=19 // pred_check
        %p189 = pneg %p96
      $region30: #{a_call__.3} parent=19 // pred_check_branch
        %191 = sbr.rel (%p189) target = $region32
      $region31: #{a_call__.3} parent=19 // pred_region
        %s192 = smul.u32 2, %s18
        %p193 = scmp.lt.s32.totalorder %s17, 1
        %s194 = scalar_select %p193, %s17, 1
        %p195 = scmp.lt.s32.totalorder %s192, 1
        %s196 = scalar_select %p195, %s192, 1
        %s197 = smul.addr %s194, 2
        %s198 = sadd.s32 %s196, %s197
        %s199 = smul.addr %s198, 8
        %s200 = scalar_lea.vmem %s2, %s199
        %s201 = smul.u32 2, %s18
      $region32: #{a_call__.3} parent=19 // pred_fallthru
        _
    $region20: #{a_call__.3} parent=5 // pred_fallthru
      _
    %p202 = scmp.le.s32.totalorder 1, %s10
    %p203 = scmp.lt.s32.totalorder %s10, 3
    %p204 = pnand %p202, %p203
    %p205 = pneg %p204
    // Predicated region
    $region33: #{a_call__.3} parent=5 // pred_check
      _
    $region34: #{a_call__.3} parent=5 // pred_check_branch
      %207 = sbr.rel (%p204) target = $region36
    $region35: #{a_call__.3} parent=5 // pred_region
      %s208 = ssub.s32 %s10, 1
      %p209 = scmp.lt.s32.totalorder %s19, 1
      %s210 = scalar_select %p209, %s19, 1
      %s211 = smul.addr %s210, 3
      %s212 = smul.addr %s211, 8
      %s213 = scalar_lea.vmem %s0, %s212
      %p214 = pneg %p48
      %p215 = pneg %p45
      %p216 = scmp.lt.s32.totalorder %s19, 1
      %s217 = scalar_select %p216, %s19, 1
      %s218 = smul.addr %s217, 3
      %s219 = smul.addr %s218, 8
      %s220 = scalar_lea.vmem %s1, %s219
      %p221 = pneg %p74
      %p222 = pneg %p71
      %s223 = smul.u32 2, %s20
      %p224 = scmp.lt.s32.totalorder %s19, 1
      %s225 = scalar_select %p224, %s19, 1
      %p226 = scmp.lt.s32.totalorder %s223, 1
      %s227 = scalar_select %p226, %s223, 1
      %s228 = smul.addr %s225, 2
      %s229 = sadd.s32 %s227, %s228
      %s230 = smul.addr %s229, 8
      %s231 = scalar_lea.vmem %s2, %s230
      %p232 = pneg %p102
      %p233 = pneg %p99
      %p234 = pneg %p123
      %p235 = pneg %p120
      %p236 = pneg %p151
      %p237 = pneg %p148
      %p238 = scmp.lt.s32.totalorder %s19, 1
      %s239 = scalar_select %p238, %s19, 1
      %p240 = scmp.lt.s32.totalorder %s20, 0
      %s241 = scalar_select %p240, %s20, 0
      %s242 = sadd.s32 %s241, %s239
      %s243 = smul.addr %s242, 8
      %s244 = scalar_lea.vmem %s4, %s243
      %p245 = scmp.lt.s32.totalorder %s19, 1
      %s246 = scalar_select %p245, %s19, 1
      %s247 = smul.addr %s246, 3
      %s248 = smul.addr %s247, 8
      %s249 = scalar_lea.vmem %s0, %s248
      %p250 = scmp.lt.s32.totalorder %s19, 1
      %s251 = scalar_select %p250, %s19, 1
      %s252 = smul.addr %s251, 3
      %s253 = smul.addr %s252, 8
      %s254 = scalar_lea.vmem %s1, %s253
      %s255 = smul.u32 2, %s20
      %p256 = scmp.lt.s32.totalorder %s19, 1
      %s257 = scalar_select %p256, %s19, 1
      %p258 = scmp.lt.s32.totalorder %s255, 1
      %s259 = scalar_select %p258, %s255, 1
      %s260 = smul.addr %s257, 2
      %s261 = sadd.s32 %s259, %s260
      %s262 = smul.addr %s261, 8
      %s263 = scalar_lea.vmem %s2, %s262
      %s264 = smul.u32 2, %s20
      %p265 = scmp.lt.s32.totalorder %s19, 1
      %s266 = scalar_select %p265, %s19, 1
      %p267 = scmp.lt.s32.totalorder %s20, 0
      %s268 = scalar_select %p267, %s20, 0
      %s269 = sadd.s32 %s268, %s266
      %s270 = smul.addr %s269, 8
      %s271 = scalar_lea.vmem %s4, %s270
      %s273 = smul.u32 %s20, 16
      %s274 = scalar_lea.vmem %s249, %s273
      %v275 = vld [vmem:[%s274] sm:$0xff]
      %v276 = vld [vmem:[%s274 + $0x8] sm:$0xff]
      %v277 = vld [vmem:[%s274 + $0x10] sm:$0xff]
      %s278 = scalar_lea.vmem %s254, %s273
      %v279 = vld [vmem:[%s278] sm:$0xff]
      %v280 = vld [vmem:[%s278 + $0x8] sm:$0xff]
      %v281 = vld [vmem:[%s278 + $0x10] sm:$0xff]
      %v282 = vld [vmem:[%s3] sm:$0xff]
      %v283 = vld [vmem:[%s3 + $0x8] sm:$0xff]
      %v284 = vpack.c.bf16 %v276, %v275
      %v285 = vpack.c.bf16 %v280, %v279
      %v286 = vld [vmem:[%s3 + $0x10] sm:$0xff]
      %v287 = vld [vmem:[%s3 + $0x18] sm:$0xff]
      %v288 = vpack.c.bf16 %v277, %v277
      %v289 = vpack.c.bf16 %v281, %v281
      %vm290 = vsmask.f32 7424
      %v292 = vshrl.u32 %v284, 16
      %v294 = vshll.u32 %v284, 16
      %v296 = vrot.slane %v294, 1
      %v297 = vor.u32 %v292, %v296
      %v299 = vshll.u32 %v288, 16
      %v301 = vrot.slane %v299, 1
      %v302 = vsel %vm290, %v297, %v301
      %v305 = vunpack.c.l.b16 %v286
      %v306 = vunpack.c.h.b16 %v286
      %v307 = vunpack.c.l.b16 %v287
      %v308 = vunpack.c.h.b16 %v287
      %v309 = vpack.c.b16 %v307, %v305
      %v310 = vpack.c.b16 %v308, %v306
      %vm313 = vcmask 130048
      %v315 = vsel %vm313, %v302, 0
      %317 = vmatpush.bf16.msra.mxu0 0
      %318 = vmatpush.bf16.msra.mxu0 0
      %319 = vmatpush.bf16.msra.mxu0 0
      %320 = vmatpush.bf16.msra.mxu0 0
      %321 = vmatpush.bf16.msra.mxu0 0
      %322 = vmatpush.bf16.msra.mxu0 0
      %323 = vmatpush.bf16.msra.mxu0 0
      %324 = vmatpush.bf16.msra.mxu0 %v309
      %325 = vmatmul.bf16.gmra.mxu0 %v315
      %v326 = vpop.f32.mrf.mxu0
      %v327 = vadd.f32 0.0, %v326
      %v328 = vpop.f32.mrf.mxu0
      %v329 = vadd.f32 0.0, %v328
      %330 = vdwg.mxu0
      %331 = vmatpush.bf16.msra.mxu0 0
      %332 = vmatpush.bf16.msra.mxu0 0
      %333 = vmatpush.bf16.msra.mxu0 0
      %334 = vmatpush.bf16.msra.mxu0 0
      %335 = vmatpush.bf16.msra.mxu0 0
      %336 = vmatpush.bf16.msra.mxu0 0
      %337 = vmatpush.bf16.msra.mxu0 0
      %338 = vmatpush.bf16.msra.mxu0 %v310
      %339 = vmatmul.bf16.gmra.mxu0 %v315
      %v340 = vpop.f32.mrf.mxu0
      %v341 = vadd.f32 0.0, %v340
      %v342 = vpop.f32.mrf.mxu0
      %v343 = vadd.f32 0.0, %v342
      %344 = vdwg.mxu0
      %v346 = vshrl.u32 %v285, 16
      %v348 = vshll.u32 %v285, 16
      %v350 = vrot.slane %v348, 1
      %v351 = vor.u32 %v346, %v350
      %v353 = vshll.u32 %v289, 16
      %v355 = vrot.slane %v353, 1
      %v356 = vsel %vm290, %v351, %v355
      %v358 = vsel %vm313, %v356, 0
      %360 = vmatpush.bf16.msra.mxu0 0
      %361 = vmatpush.bf16.msra.mxu0 0
      %362 = vmatpush.bf16.msra.mxu0 0
      %363 = vmatpush.bf16.msra.mxu0 0
      %364 = vmatpush.bf16.msra.mxu0 0
      %365 = vmatpush.bf16.msra.mxu0 0
      %366 = vmatpush.bf16.msra.mxu0 0
      %367 = vmatpush.bf16.msra.mxu0 %v309
      %368 = vmatmul.bf16.gmra.mxu0 %v358
      %v369 = vpop.f32.mrf.mxu0
      %v370 = vadd.f32 0.0, %v369
      %v371 = vpop.f32.mrf.mxu0
      %v372 = vadd.f32 0.0, %v371
      %373 = vdwg.mxu0
      %374 = vmatpush.bf16.msra.mxu0 0
      %375 = vmatpush.bf16.msra.mxu0 0
      %376 = vmatpush.bf16.msra.mxu0 0
      %377 = vmatpush.bf16.msra.mxu0 0
      %378 = vmatpush.bf16.msra.mxu0 0
      %379 = vmatpush.bf16.msra.mxu0 0
      %380 = vmatpush.bf16.msra.mxu0 0
      %381 = vmatpush.bf16.msra.mxu0 %v310
      %382 = vmatmul.bf16.gmra.mxu0 %v358
      %v383 = vpop.f32.mrf.mxu0
      %v384 = vadd.f32 0.0, %v383
      %v385 = vpop.f32.mrf.mxu0
      %v386 = vadd.f32 0.0, %v385
      %387 = vdwg.mxu0
      %v390 = vunpack.c.l.b16 %v282
      %v391 = vunpack.c.h.b16 %v282
      %v392 = vunpack.c.l.b16 %v283
      %v393 = vunpack.c.h.b16 %v283
      %v394 = vpack.c.b16 %v392, %v390
      %v395 = vpack.c.b16 %v393, %v391
      %v398 = vsel %vm313, %v284, 0
      %400 = vmatpush.bf16.msra.mxu0 0
      %401 = vmatpush.bf16.msra.mxu0 0
      %402 = vmatpush.bf16.msra.mxu0 0
      %403 = vmatpush.bf16.msra.mxu0 0
      %404 = vmatpush.bf16.msra.mxu0 0
      %405 = vmatpush.bf16.msra.mxu0 0
      %406 = vmatpush.bf16.msra.mxu0 0
      %407 = vmatpush.bf16.msra.mxu0 %v394
      %408 = vmatmul.bf16.gmra.mxu0 %v398
      %v409 = vpop.f32.mrf.mxu0
      %v410 = vadd.f32 %v327, %v409
      %v411 = vpop.f32.mrf.mxu0
      %v412 = vadd.f32 %v329, %v411
      %413 = vdwg.mxu0
      %414 = vmatpush.bf16.msra.mxu0 0
      %415 = vmatpush.bf16.msra.mxu0 0
      %416 = vmatpush.bf16.msra.mxu0 0
      %417 = vmatpush.bf16.msra.mxu0 0
      %418 = vmatpush.bf16.msra.mxu0 0
      %419 = vmatpush.bf16.msra.mxu0 0
      %420 = vmatpush.bf16.msra.mxu0 0
      %421 = vmatpush.bf16.msra.mxu0 %v395
      %422 = vmatmul.bf16.gmra.mxu0 %v398
      %v423 = vpop.f32.mrf.mxu0
      %v424 = vadd.f32 %v341, %v423
      %v425 = vpop.f32.mrf.mxu0
      %v426 = vadd.f32 %v343, %v425
      %427 = vdwg.mxu0
      %v428 = vsel %vm313, %v285, 0
      %430 = vmatpush.bf16.msra.mxu0 0
      %431 = vmatpush.bf16.msra.mxu0 0
      %432 = vmatpush.bf16.msra.mxu0 0
      %433 = vmatpush.bf16.msra.mxu0 0
      %434 = vmatpush.bf16.msra.mxu0 0
      %435 = vmatpush.bf16.msra.mxu0 0
      %436 = vmatpush.bf16.msra.mxu0 0
      %437 = vmatpush.bf16.msra.mxu0 %v394
      %438 = vmatmul.bf16.gmra.mxu0 %v428
      %v439 = vpop.f32.mrf.mxu0
      %v440 = vadd.f32 %v370, %v439
      %v441 = vpop.f32.mrf.mxu0
      %v442 = vadd.f32 %v372, %v441
      %443 = vdwg.mxu0
      %444 = vmatpush.bf16.msra.mxu0 0
      %445 = vmatpush.bf16.msra.mxu0 0
      %446 = vmatpush.bf16.msra.mxu0 0
      %447 = vmatpush.bf16.msra.mxu0 0
      %448 = vmatpush.bf16.msra.mxu0 0
      %449 = vmatpush.bf16.msra.mxu0 0
      %450 = vmatpush.bf16.msra.mxu0 0
      %451 = vmatpush.bf16.msra.mxu0 %v395
      %452 = vmatmul.bf16.gmra.mxu0 %v428
      %v453 = vpop.f32.mrf.mxu0
      %v454 = vadd.f32 %v384, %v453
      %v455 = vpop.f32.mrf.mxu0
      %v456 = vadd.f32 %v386, %v455
      %457 = vdwg.mxu0
      %v458 = vld [vmem:[%s3 + $0x20] sm:$0xff]
      %v459 = vld [vmem:[%s3 + $0x28] sm:$0xff]
      %vm462 = vcmask 1046528
      %v463 = vrot.slane %v284, 1
      %v464 = vrot.slane %v288, 1
      %v465 = vsel %vm462, %v463, %v464
      %v468 = vunpack.c.l.b16 %v458
      %v469 = vunpack.c.h.b16 %v458
      %v470 = vunpack.c.l.b16 %v459
      %v471 = vunpack.c.h.b16 %v459
      %v472 = vpack.c.b16 %v470, %v468
      %v473 = vpack.c.b16 %v471, %v469
      %v477 = vsel %vm313, %v465, 0
      %479 = vmatpush.bf16.msra.mxu0 0
      %480 = vmatpush.bf16.msra.mxu0 0
      %481 = vmatpush.bf16.msra.mxu0 0
      %482 = vmatpush.bf16.msra.mxu0 0
      %483 = vmatpush.bf16.msra.mxu0 0
      %484 = vmatpush.bf16.msra.mxu0 0
      %485 = vmatpush.bf16.msra.mxu0 0
      %486 = vmatpush.bf16.msra.mxu0 %v472
      %487 = vmatmul.bf16.gmra.mxu0 %v477
      %v488 = vpop.f32.mrf.mxu0
      %v489 = vadd.f32 0.0, %v488
      %v490 = vpop.f32.mrf.mxu0
      %v491 = vadd.f32 0.0, %v490
      %492 = vdwg.mxu0
      %493 = vmatpush.bf16.msra.mxu0 0
      %494 = vmatpush.bf16.msra.mxu0 0
      %495 = vmatpush.bf16.msra.mxu0 0
      %496 = vmatpush.bf16.msra.mxu0 0
      %497 = vmatpush.bf16.msra.mxu0 0
      %498 = vmatpush.bf16.msra.mxu0 0
      %499 = vmatpush.bf16.msra.mxu0 0
      %500 = vmatpush.bf16.msra.mxu0 %v473
      %501 = vmatmul.bf16.gmra.mxu0 %v477
      %v502 = vpop.f32.mrf.mxu0
      %v503 = vadd.f32 0.0, %v502
      %v504 = vpop.f32.mrf.mxu0
      %v505 = vadd.f32 0.0, %v504
      %506 = vdwg.mxu0
      %v509 = vrot.slane %v285, 1
      %v510 = vrot.slane %v289, 1
      %v511 = vsel %vm462, %v509, %v510
      %v513 = vsel %vm313, %v511, 0
      %515 = vmatpush.bf16.msra.mxu0 0
      %516 = vmatpush.bf16.msra.mxu0 0
      %517 = vmatpush.bf16.msra.mxu0 0
      %518 = vmatpush.bf16.msra.mxu0 0
      %519 = vmatpush.bf16.msra.mxu0 0
      %520 = vmatpush.bf16.msra.mxu0 0
      %521 = vmatpush.bf16.msra.mxu0 0
      %522 = vmatpush.bf16.msra.mxu0 %v472
      %523 = vmatmul.bf16.gmra.mxu0 %v513
      %v524 = vpop.f32.mrf.mxu0
      %v525 = vadd.f32 0.0, %v524
      %v526 = vpop.f32.mrf.mxu0
      %v527 = vadd.f32 0.0, %v526
      %528 = vdwg.mxu0
      %529 = vmatpush.bf16.msra.mxu0 0
      %530 = vmatpush.bf16.msra.mxu0 0
      %531 = vmatpush.bf16.msra.mxu0 0
      %532 = vmatpush.bf16.msra.mxu0 0
      %533 = vmatpush.bf16.msra.mxu0 0
      %534 = vmatpush.bf16.msra.mxu0 0
      %535 = vmatpush.bf16.msra.mxu0 0
      %536 = vmatpush.bf16.msra.mxu0 %v473
      %537 = vmatmul.bf16.gmra.mxu0 %v513
      %v538 = vpop.f32.mrf.mxu0
      %v539 = vadd.f32 0.0, %v538
      %v540 = vpop.f32.mrf.mxu0
      %v541 = vadd.f32 0.0, %v540
      %542 = vdwg.mxu0
      %v543 = vadd.f32 %v410, %v489
      %v544 = vadd.f32 %v424, %v503
      %v545 = vadd.f32 %v412, %v491
      %v546 = vadd.f32 %v426, %v505
      %v547 = vadd.f32 %v440, %v525
      %v548 = vadd.f32 %v454, %v539
      %v549 = vadd.f32 %v442, %v527
      %v550 = vadd.f32 %v456, %v541
      %v551 = vld [vmem:[%s3 + $0x30] sm:$0xff]
      %v552 = vld [vmem:[%s3 + $0x38] sm:$0xff]
      %vm553 = vsmask.f32 6400
      %v554 = vrot.slane %v292, 1
      %v555 = vrot.slane %v294, 2
      %v556 = vor.u32 %v554, %v555
      %v557 = vshrl.u32 %v288, 16
      %v559 = vrot.slane %v557, 1
      %v560 = vrot.slane %v299, 2
      %v561 = vor.u32 %v559, %v560
      %v562 = vsel %vm553, %v556, %v561
      %v565 = vunpack.c.l.b16 %v551
      %v566 = vunpack.c.h.b16 %v551
      %v567 = vunpack.c.l.b16 %v552
      %v568 = vunpack.c.h.b16 %v552
      %v569 = vpack.c.b16 %v567, %v565
      %v570 = vpack.c.b16 %v568, %v566
      %v574 = vsel %vm313, %v562, 0
      %576 = vmatpush.bf16.msra.mxu0 0
      %577 = vmatpush.bf16.msra.mxu0 0
      %578 = vmatpush.bf16.msra.mxu0 0
      %579 = vmatpush.bf16.msra.mxu0 0
      %580 = vmatpush.bf16.msra.mxu0 0
      %581 = vmatpush.bf16.msra.mxu0 0
      %582 = vmatpush.bf16.msra.mxu0 0
      %583 = vmatpush.bf16.msra.mxu0 %v569
      %584 = vmatmul.bf16.gmra.mxu0 %v574
      %v585 = vpop.f32.mrf.mxu0
      %v586 = vadd.f32 0.0, %v585
      %v587 = vpop.f32.mrf.mxu0
      %v588 = vadd.f32 0.0, %v587
      %589 = vdwg.mxu0
      %590 = vmatpush.bf16.msra.mxu0 0
      %591 = vmatpush.bf16.msra.mxu0 0
      %592 = vmatpush.bf16.msra.mxu0 0
      %593 = vmatpush.bf16.msra.mxu0 0
      %594 = vmatpush.bf16.msra.mxu0 0
      %595 = vmatpush.bf16.msra.mxu0 0
      %596 = vmatpush.bf16.msra.mxu0 0
      %597 = vmatpush.bf16.msra.mxu0 %v570
      %598 = vmatmul.bf16.gmra.mxu0 %v574
      %v599 = vpop.f32.mrf.mxu0
      %v600 = vadd.f32 0.0, %v599
      %v601 = vpop.f32.mrf.mxu0
      %v602 = vadd.f32 0.0, %v601
      %603 = vdwg.mxu0
      %v604 = vrot.slane %v346, 1
      %v605 = vrot.slane %v348, 2
      %v606 = vor.u32 %v604, %v605
      %v607 = vshrl.u32 %v289, 16
      %v609 = vrot.slane %v607, 1
      %v610 = vrot.slane %v353, 2
      %v611 = vor.u32 %v609, %v610
      %v612 = vsel %vm553, %v606, %v611
      %v614 = vsel %vm313, %v612, 0
      %616 = vmatpush.bf16.msra.mxu0 0
      %617 = vmatpush.bf16.msra.mxu0 0
      %618 = vmatpush.bf16.msra.mxu0 0
      %619 = vmatpush.bf16.msra.mxu0 0
      %620 = vmatpush.bf16.msra.mxu0 0
      %621 = vmatpush.bf16.msra.mxu0 0
      %622 = vmatpush.bf16.msra.mxu0 0
      %623 = vmatpush.bf16.msra.mxu0 %v569
      %624 = vmatmul.bf16.gmra.mxu0 %v614
      %v625 = vpop.f32.mrf.mxu0
      %v626 = vadd.f32 0.0, %v625
      %v627 = vpop.f32.mrf.mxu0
      %v628 = vadd.f32 0.0, %v627
      %629 = vdwg.mxu0
      %630 = vmatpush.bf16.msra.mxu0 0
      %631 = vmatpush.bf16.msra.mxu0 0
      %632 = vmatpush.bf16.msra.mxu0 0
      %633 = vmatpush.bf16.msra.mxu0 0
      %634 = vmatpush.bf16.msra.mxu0 0
      %635 = vmatpush.bf16.msra.mxu0 0
      %636 = vmatpush.bf16.msra.mxu0 0
      %637 = vmatpush.bf16.msra.mxu0 %v570
      %638 = vmatmul.bf16.gmra.mxu0 %v614
      %v639 = vpop.f32.mrf.mxu0
      %v640 = vadd.f32 0.0, %v639
      %v641 = vpop.f32.mrf.mxu0
      %v642 = vadd.f32 0.0, %v641
      %643 = vdwg.mxu0
      %v644 = vadd.f32 %v543, %v586
      %v645 = vadd.f32 %v544, %v600
      %v646 = vadd.f32 %v545, %v588
      %v647 = vadd.f32 %v546, %v602
      %v648 = vadd.f32 %v547, %v626
      %v649 = vadd.f32 %v548, %v640
      %v650 = vadd.f32 %v549, %v628
      %v651 = vadd.f32 %v550, %v642
      %v652 = vmul.f32 %v644, %v644
      %v653 = vmul.f32 %v646, %v646
      %v654 = vmul.f32 %v645, %v645
      %v655 = vmul.f32 %v647, %v647
      %658 = vrot.lane.b32.xlu0 %v654, 1
      %v659 = vpop.permute.xlu0 %658
      %660 = vrot.lane.b32.xlu0 %v655, 1
      %v661 = vpop.permute.xlu0 %660
      %v664 = vadd.f32 %v652, %v659
      %v665 = vadd.f32 %v653, %v661
      %v666 = vrsqrt.pop %v664
      %v667 = vmul.f32 %v666, %v664
      %v668 = vmul.f32 %v667, %v666
      %v669 = vmul.f32 0.5, %v668
      %v670 = vsub.f32 1.5, %v669
      %v671 = vmul.f32 %v666, %v670
      %v672 = vmul.f32 %v664, %v671
      %vm673 = vcmp.eq.f32.partialorder %v664, inf
      %v674 = vsel %vm673, %v664, %v672
      %vm675 = vcmp.eq.f32.partialorder %v664, 0.0
      %v676 = vand.u32 %v664, 2147483648
      %v677 = vsel %vm675, %v676, %v674
      %v678 = vrsqrt.pop %v665
      %v679 = vmul.f32 %v678, %v665
      %v680 = vmul.f32 %v679, %v678
      %v681 = vmul.f32 0.5, %v680
      %v682 = vsub.f32 1.5, %v681
      %v683 = vmul.f32 %v678, %v682
      %v684 = vmul.f32 %v665, %v683
      %vm685 = vcmp.eq.f32.partialorder %v665, inf
      %v686 = vsel %vm685, %v665, %v684
      %vm687 = vcmp.eq.f32.partialorder %v665, 0.0
      %v688 = vand.u32 %v665, 2147483648
      %v689 = vsel %vm687, %v688, %v686
      %v690 = vand.u32 2147483647, %v644
      %v691 = vand.u32 2147483647, %v646
      %v692 = vmul.f32 %v648, %v648
      %v693 = vmul.f32 %v650, %v650
      %v694 = vmul.f32 %v649, %v649
      %v695 = vmul.f32 %v651, %v651
      %698 = vrot.lane.b32.xlu0 %v694, 1
      %v699 = vpop.permute.xlu0 %698
      %700 = vrot.lane.b32.xlu0 %v695, 1
      %v701 = vpop.permute.xlu0 %700
      %v704 = vadd.f32 %v692, %v699
      %v705 = vadd.f32 %v693, %v701
      %v706 = vrsqrt.pop %v704
      %v707 = vmul.f32 %v706, %v704
      %v708 = vmul.f32 %v707, %v706
      %v709 = vmul.f32 0.5, %v708
      %v710 = vsub.f32 1.5, %v709
      %v711 = vmul.f32 %v706, %v710
      %v712 = vmul.f32 %v704, %v711
      %vm713 = vcmp.eq.f32.partialorder %v704, inf
      %v714 = vsel %vm713, %v704, %v712
      %vm715 = vcmp.eq.f32.partialorder %v704, 0.0
      %v716 = vand.u32 %v704, 2147483648
      %v717 = vsel %vm715, %v716, %v714
      %v718 = vrsqrt.pop %v705
      %v719 = vmul.f32 %v718, %v705
      %v720 = vmul.f32 %v719, %v718
      %v721 = vmul.f32 0.5, %v720
      %v722 = vsub.f32 1.5, %v721
      %v723 = vmul.f32 %v718, %v722
      %v724 = vmul.f32 %v705, %v723
      %vm725 = vcmp.eq.f32.partialorder %v705, inf
      %v726 = vsel %vm725, %v705, %v724
      %vm727 = vcmp.eq.f32.partialorder %v705, 0.0
      %v728 = vand.u32 %v705, 2147483648
      %v729 = vsel %vm727, %v728, %v726
      %v730 = vand.u32 2147483647, %v648
      %v731 = vand.u32 2147483647, %v650
      %v732 = vsub.f32 %v677, %v717
      %v733 = vsub.f32 %v689, %v729
      %v734 = vsub.f32 %v690, %v730
      %v735 = vsub.f32 %v691, %v731
      %v736 = vmul.f32 %v732, %v732
      %v737 = vmul.f32 %v733, %v733
      %740 = vrot.lane.b32.xlu0 %v736, 127
      %v741 = vpop.permute.xlu0 %740
      %742 = vrot.lane.b32.xlu0 %v737, 127
      %v743 = vpop.permute.xlu0 %742
      %vm746 = vcmask 1039360
      %v747 = vsel %vm746, %v741, 0.0
      %748 = vadd.xlane.f32.xlu0 %v747
      %v749 = vpop.xlane.xlu0 %748
      %v750 = vsel %vm746, %v743, 0.0
      %751 = vadd.xlane.f32.xlu0 %v750
      %v752 = vpop.xlane.xlu0 %751
      %v753 = vmul.f32 %v734, %v734
      %v754 = vmul.f32 %v735, %v735
      %v755 = vadd.f32 %v749, %v753
      %v756 = vadd.f32 %v752, %v754
      %v757 = vld [vmem:[%s263] sm:$0xff]
      %v758 = vld [vmem:[%s263 + $0x8] sm:$0xff]
      %v759 = vmul.f32 %v755, %v757
      %v760 = vmul.f32 %v756, %v758
      %vm761 = vcmask 7168
      %v762 = vsel %vm761, %v759, 0.0
      %v763 = vsel %vm761, %v760, 0.0
      %v764 = vadd.f32 %v762, %v763
      %765 = vadd.xlane.f32.xlu0 %v764
      %v766 = vpop.xlane.xlu0 %765
      %v767 = vrot.slane %v766, 4
      %v768 = vadd.f32 %v766, %v767
      %v769 = vrot.slane %v768, 2
      %v770 = vadd.f32 %v768, %v769
      %v771 = vrot.slane %v770, 1
      %v772 = vadd.f32 %v770, %v771
      %s773 = vtos %v772
      %v774 = vstv %s773
      %775 = vst [vmem:[%s271] sm:$0xff] %v774
      %p776 = scmp.lt.s32.totalorder %s19, 1
      %s777 = scalar_select %p776, %s19, 1
      %p778 = scmp.lt.s32.totalorder %s20, 0
      %s779 = scalar_select %p778, %s20, 0
      %s780 = sadd.s32 %s779, %s777
      %s781 = smul.addr %s780, 8
      %s782 = scalar_lea.vmem %s4, %s781
      // Predicated region
      $region37: #{a_call__.3} parent=35 // pred_check
        %p783 = pneg %p148
      $region38: #{a_call__.3} parent=35 // pred_check_branch
        %785 = sbr.rel (%p783) target = $region40
      $region39: #{a_call__.3} parent=35 // pred_region
        _
      $region40: #{a_call__.3} parent=35 // pred_fallthru
        _
    $region36: #{a_call__.3} parent=5 // pred_fallthru
      _
    %p786 = scmp.le.s32.totalorder 2, %s10
    // Predicated region
    $region41: #{a_call__.3} parent=5 // pred_check
      %p787 = pneg %p786
    $region42: #{a_call__.3} parent=5 // pred_check_branch
      %789 = sbr.rel (%p787) target = $region44
    $region43: #{a_call__.3} parent=5 // pred_region
      %s790 = ssub.s32 %s10, 2
      // Predicated region
      $region45: #{a_call__.3} parent=43 // pred_check
        %p791 = pneg %p154
      $region46: #{a_call__.3} parent=43 // pred_check_branch
        %793 = sbr.rel (%p791) target = $region48
      $region47: #{a_call__.3} parent=43 // pred_region
        %p794 = scmp.lt.s32.totalorder %s21, 1
        %s795 = scalar_select %p794, %s21, 1
        %p796 = scmp.lt.s32.totalorder %s22, 0
        %s797 = scalar_select %p796, %s22, 0
        %s798 = sadd.s32 %s797, %s795
        %s799 = smul.addr %s798, 8
        %s800 = scalar_lea.vmem %s4, %s799
      $region48: #{a_call__.3} parent=43 // pred_fallthru
        _
    $region44: #{a_call__.3} parent=5 // pred_fallthru
      _
  $region6: #{a_call__.3} parent=0 // loop_footer
    %s14 = sadd.s32 1, %s10
  $region7: #{a_call__.3} parent=0 // loop_footer_branch
    %9 = sbr.rel target = $region3
  $region8: #{a_call__.3} parent=0 // loop_exit
    _

</llo_original>
